<compile_context>
chip_gen: v6e
topology: v6e:2x2x1
jax: 0.10.0
libtpu: 0.0.40
codegen_flags: <defaults>
</compile_context>

<pallas_src>
import jax
import jax.numpy as jnp
from jax import lax
from jax.experimental import pallas as pl
from jax.experimental.pallas import tpu as pltpu
import numpy as np


# ----------------------------- fused Pallas kernel ------------------------- #

def _fused_kernel(x_ref, m1_ref, c1b_ref, sr1_ref, sc1_ref,
                  m2_ref, c2b_ref, sr2_ref, sc2_ref,
                  f1w_ref, f1b_ref, f2w_ref, f2b_ref, o_ref):
    f32 = jnp.float32

    # conv1: 5 lowered matmuls -> a1[h, c*24 + w] = conv1(x)[c, h, w] + b1[c]
    a1 = jnp.zeros((24, 240), f32) + c1b_ref[...]
    for ki in range(5):
        xs = x_ref[0, 0, ki:ki + 24, :]                             # (24, 28)
        a1 = a1 + jnp.dot(xs, m1_ref[ki],
                          preferred_element_type=f32)               # (24, 240)

    # maxpool 2x2 + relu -> a1p[i, c*12 + j]
    r = jnp.maximum(a1[0:23, :], a1[1:24, :])                       # (23, 240)
    p = jnp.dot(sr1_ref[...], r, preferred_element_type=f32)        # (12, 240)
    c = jnp.maximum(p[:, 0:239], p[:, 1:240])                       # (12, 239)
    a1p = jnp.dot(c, sc1_ref[...], preferred_element_type=f32)      # (12, 120)
    a1p = jnp.maximum(a1p, 0.0)

    # conv2 (dropout2d == identity): a2[i, co*8 + j] = conv2(a1p)[co, i, j] + b2
    a2 = jnp.zeros((8, 160), f32) + c2b_ref[...]
    for ki in range(5):
        ys = a1p[ki:ki + 8, :]                                      # (8, 120)
        a2 = a2 + jnp.dot(ys, m2_ref[ki],
                          preferred_element_type=f32)               # (8, 160)

    # maxpool 2x2 + relu -> a2p[i, co*4 + j]
    r2 = jnp.maximum(a2[0:7, :], a2[1:8, :])                        # (7, 160)
    p2 = jnp.dot(sr2_ref[...], r2, preferred_element_type=f32)      # (4, 160)
    c2 = jnp.maximum(p2[:, 0:159], p2[:, 1:160])                    # (4, 159)
    a2p = jnp.dot(c2, sc2_ref[...], preferred_element_type=f32)     # (4, 80)
    a2p = jnp.maximum(a2p, 0.0)

    # fc1 (+relu, dropout == identity) + fc2; fc1 weights pre-permuted to the
    # kernel's (i, co, j) flatten order and split over the 4 rows of a2p.
    h = jnp.zeros((1, 50), f32)
    for i in range(4):
        h = h + jnp.dot(a2p[i:i + 1, :], f1w_ref[i],
                        preferred_element_type=f32)                 # (1, 50)
    h = jnp.maximum(h + f1b_ref[...], 0.0)
    out = jnp.dot(h, f2w_ref[...], preferred_element_type=f32) + f2b_ref[...]
    o_ref[0] = out                                                  # (1, 36)


def forward(x, kp):
    """x: (B, 1, 28, 28) f32 -> (B, 36) f32."""
    B = x.shape[0]

    def _const_spec(a):
        nd = a.ndim
        return pl.BlockSpec(a.shape, lambda b, _n=nd: (0,) * _n)

    consts = (kp["M1"], kp["c1b"], kp["SR1"], kp["SC1"],
              kp["M2"], kp["c2b"], kp["SR2"], kp["SC2"],
              kp["W1FC"], kp["f1b"], kp["W2FC"], kp["f2b"])

    out = pl.pallas_call(
        _fused_kernel,
        out_shape=jax.ShapeDtypeStruct((B, 1, 36), jnp.float32),
        grid=(B,),
        in_specs=[pl.BlockSpec((1, 1, 28, 28), lambda b: (b, 0, 0, 0))]
                 + [_const_spec(a) for a in consts],
        out_specs=pl.BlockSpec((1, 1, 36), lambda b: (b, 0, 0)),
        compiler_params=pltpu.CompilerParams(
            dimension_semantics=("parallel",)),
    )(x, *consts)
    return out.reshape(B, 36)


# --------------------- parameter preparation (init-time) ------------------- #

def prepare_kernel_params(raw):
    w1 = np.asarray(raw["conv1_w"], np.float32)   # (10, 1, 5, 5)
    w2 = np.asarray(raw["conv2_w"], np.float32)   # (20, 10, 5, 5)
    b1 = np.asarray(raw["conv1_b"], np.float32)   # (10,)
    b2 = np.asarray(raw["conv2_b"], np.float32)   # (20,)
    f1w = np.asarray(raw["fc1_w"], np.float32)    # (50, 320)
    f2w = np.asarray(raw["fc2_w"], np.float32)    # (36, 50)

    # conv1 lowered weights: M1[ki, w_out + kj, c*24 + w_out] = w1[c,0,ki,kj]
    M1 = np.zeros((5, 28, 240), np.float32)
    for ki in range(5):
        for cc in range(10):
            for wo in range(24):
                for kj in range(5):
                    M1[ki, wo + kj, cc * 24 + wo] = w1[cc, 0, ki, kj]

    # conv2 lowered weights: M2[ki, ci*12 + (j+kj), co*8 + j] = w2[co,ci,ki,kj]
    M2 = np.zeros((5, 120, 160), np.float32)
    for ki in range(5):
        for co in range(20):
            for ci in range(10):
                for j in range(8):
                    for kj in range(5):
                        M2[ki, ci * 12 + j + kj, co * 8 + j] = w2[co, ci, ki, kj]

    # exact 0/1 subsample selectors for the 2x2 max-pools
    SR1 = np.zeros((12, 23), np.float32)
    SR1[np.arange(12), 2 * np.arange(12)] = 1.0
    SC1 = np.zeros((239, 120), np.float32)
    for cc in range(10):
        for j in range(12):
            SC1[cc * 24 + 2 * j, cc * 12 + j] = 1.0
    SR2 = np.zeros((4, 7), np.float32)
    SR2[np.arange(4), 2 * np.arange(4)] = 1.0
    SC2 = np.zeros((159, 80), np.float32)
    for co in range(20):
        for j in range(4):
            SC2[co * 8 + 2 * j, co * 4 + j] = 1.0

    # fc1 weights permuted to the kernel's (i, co, j) layout, split over i:
    # W1FC[i, co*4 + j, k] = fc1_w[k, co*16 + i*4 + j]
    W1FC = np.transpose(f1w.reshape(50, 20, 4, 4),
                        (2, 1, 3, 0)).reshape(4, 80, 50)

    return {
        "M1": jnp.asarray(M1),
        "c1b": jnp.asarray(np.repeat(b1, 24)[None, :]),    # (1, 240)
        "SR1": jnp.asarray(SR1), "SC1": jnp.asarray(SC1),
        "M2": jnp.asarray(M2),
        "c2b": jnp.asarray(np.repeat(b2, 8)[None, :]),     # (1, 160)
        "SR2": jnp.asarray(SR2), "SC2": jnp.asarray(SC2),
        "W1FC": jnp.asarray(W1FC),
        "f1b": jnp.asarray(raw["fc1_b"]).reshape(1, 50),
        "W2FC": jnp.asarray(np.ascontiguousarray(f2w.T)),  # (50, 36)
        "f2b": jnp.asarray(raw["fc2_b"]).reshape(1, 36),
    }


def init_params(key):
    def uinit(k, shape, fan_in):
        bound = 1.0 / np.sqrt(fan_in)
        return jax.random.uniform(k, shape, jnp.float32, -bound, bound)

    ks = jax.random.split(key, 8)
    raw = {
        "conv1_w": uinit(ks[0], (10, 1, 5, 5), 1 * 5 * 5),
        "conv1_b": uinit(ks[1], (10,), 1 * 5 * 5),
        "conv2_w": uinit(ks[2], (20, 10, 5, 5), 10 * 5 * 5),
        "conv2_b": uinit(ks[3], (20,), 10 * 5 * 5),
        "fc1_w": uinit(ks[4], (50, 320), 320),
        "fc1_b": uinit(ks[5], (50,), 320),
        "fc2_w": uinit(ks[6], (36, 50), 50),
        "fc2_b": uinit(ks[7], (36,), 50),
    }
    return raw, prepare_kernel_params(raw)


# ------------------------------ JAX reference ------------------------------ #

def maxpool2x2(x):  # (B, C, H, W) -> (B, C, H//2, W//2)
    B, C, H, W = x.shape
    return jnp.max(x.reshape(B, C, H // 2, 2, W // 2, 2), axis=(3, 5))


def ref_forward(x, raw):
    """Pure-JAX reference in PyTorch layout/ordering (dropout == identity)."""
    dn = ("NCHW", "OIHW", "NCHW")
    y = lax.conv_general_dilated(x, raw["conv1_w"], (1, 1), "VALID",
                                 dimension_numbers=dn)
    y = y + raw["conv1_b"].reshape(1, -1, 1, 1)
    y = jnp.maximum(maxpool2x2(y), 0.0)
    y = lax.conv_general_dilated(y, raw["conv2_w"], (1, 1), "VALID",
                                 dimension_numbers=dn)
    y = y + raw["conv2_b"].reshape(1, -1, 1, 1)
    y = jnp.maximum(maxpool2x2(y), 0.0)
    y = y.reshape(y.shape[0], -1)
    y = jnp.maximum(y @ raw["fc1_w"].T + raw["fc1_b"], 0.0)
    return y @ raw["fc2_w"].T + raw["fc2_b"]


# --------------------------------- main ------------------------------------ #

if __name__ == "__main__":
    key = jax.random.PRNGKey(0)
    pkey, xkey = jax.random.split(key)
    raw, kparams = init_params(pkey)

    # Input must be 28x28 so the flatten yields 320 = 20*4*4.
    x = jax.random.normal(xkey, (2, 1, 28, 28), jnp.float32)

    out = jax.block_until_ready(forward(x, kparams))
    ref = jax.block_until_ready(ref_forward(x, raw))

    assert out.shape == (2, 36), out.shape
    # Tolerance covers MXU default-precision differences between the Pallas
    # matmuls and XLA's conv/dot lowering of the reference.
    np.testing.assert_allclose(np.asarray(out), np.asarray(ref),
                               rtol=5e-3, atol=5e-3)
    print("KERNEL_OK")
</pallas_src>

<mosaic_0001>
module attributes {stable_mosaic.version = 11 : i64} {
  func.func @_fused_kernel(%arg0: i32, %arg1: memref<1x1x28x28xf32, #tpu.memory_space<vmem>>, %arg2: memref<5x28x240xf32, #tpu.memory_space<vmem>>, %arg3: memref<1x240xf32, #tpu.memory_space<vmem>>, %arg4: memref<12x23xf32, #tpu.memory_space<vmem>>, %arg5: memref<239x120xf32, #tpu.memory_space<vmem>>, %arg6: memref<5x120x160xf32, #tpu.memory_space<vmem>>, %arg7: memref<1x160xf32, #tpu.memory_space<vmem>>, %arg8: memref<4x7xf32, #tpu.memory_space<vmem>>, %arg9: memref<159x80xf32, #tpu.memory_space<vmem>>, %arg10: memref<4x80x50xf32, #tpu.memory_space<vmem>>, %arg11: memref<1x50xf32, #tpu.memory_space<vmem>>, %arg12: memref<50x36xf32, #tpu.memory_space<vmem>>, %arg13: memref<1x36xf32, #tpu.memory_space<vmem>>, %arg14: memref<1x1x36xf32, #tpu.memory_space<vmem>>) attributes {dimension_semantics = [#tpu.dimension_semantics<parallel>], iteration_bounds = array<i64: 2>, scalar_prefetch = 0 : i64, scratch_operands = 0 : i64, tpu.core_type = #tpu.core_type<tc>, window_params = [{transform_indices = @transform_0, window_bounds = array<i64: 1, 1, 28, 28>}, {pipeline_mode = #tpu.pipeline_mode<synchronous>, transform_indices = @transform_1, window_bounds = array<i64: 5, 28, 240>}, {pipeline_mode = #tpu.pipeline_mode<synchronous>, transform_indices = @transform_2, window_bounds = array<i64: 1, 240>}, {pipeline_mode = #tpu.pipeline_mode<synchronous>, transform_indices = @transform_3, window_bounds = array<i64: 12, 23>}, {pipeline_mode = #tpu.pipeline_mode<synchronous>, transform_indices = @transform_4, window_bounds = array<i64: 239, 120>}, {pipeline_mode = #tpu.pipeline_mode<synchronous>, transform_indices = @transform_5, window_bounds = array<i64: 5, 120, 160>}, {pipeline_mode = #tpu.pipeline_mode<synchronous>, transform_indices = @transform_6, window_bounds = array<i64: 1, 160>}, {pipeline_mode = #tpu.pipeline_mode<synchronous>, transform_indices = @transform_7, window_bounds = array<i64: 4, 7>}, {pipeline_mode = #tpu.pipeline_mode<synchronous>, transform_indices = @transform_8, window_bounds = array<i64: 159, 80>}, {pipeline_mode = #tpu.pipeline_mode<synchronous>, transform_indices = @transform_9, window_bounds = array<i64: 4, 80, 50>}, {pipeline_mode = #tpu.pipeline_mode<synchronous>, transform_indices = @transform_10, window_bounds = array<i64: 1, 50>}, {pipeline_mode = #tpu.pipeline_mode<synchronous>, transform_indices = @transform_11, window_bounds = array<i64: 50, 36>}, {pipeline_mode = #tpu.pipeline_mode<synchronous>, transform_indices = @transform_12, window_bounds = array<i64: 1, 36>}, {transform_indices = @transform_13, window_bounds = array<i64: 1, 1, 36>}]} {
    %cst = arith.constant 0.000000e+00 : f32
    %0 = vector.broadcast %cst : f32 to vector<24x240xf32>
    %c0 = arith.constant 0 : index
    %c0_0 = arith.constant 0 : index
    %1 = vector.load %arg3[%c0, %c0_0] : memref<1x240xf32, #tpu.memory_space<vmem>>, vector<1x240xf32>
    %2 = vector.broadcast %1 : vector<1x240xf32> to vector<24x240xf32>
    %3 = arith.addf %0, %2 : vector<24x240xf32>
    %c0_1 = arith.constant 0 : index
    %c0_2 = arith.constant 0 : index
    %c0_3 = arith.constant 0 : index
    %c0_4 = arith.constant 0 : index
    %4 = vector.load %arg1[%c0_1, %c0_2, %c0_3, %c0_4] : memref<1x1x28x28xf32, #tpu.memory_space<vmem>>, vector<1x1x24x28xf32>
    %5 = vector.shape_cast %4 : vector<1x1x24x28xf32> to vector<24x28xf32>
    %c0_5 = arith.constant 0 : index
    %c0_6 = arith.constant 0 : index
    %c0_7 = arith.constant 0 : index
    %6 = vector.load %arg2[%c0_5, %c0_6, %c0_7] : memref<5x28x240xf32, #tpu.memory_space<vmem>>, vector<1x28x240xf32>
    %7 = vector.shape_cast %6 : vector<1x28x240xf32> to vector<28x240xf32>
    %cst_8 = arith.constant dense<0.000000e+00> : vector<24x240xf32>
    %8 = tpu.matmul %5, %7, %cst_8 {dimension_numbers = #tpu.dot_dimension_numbers<[1], [0], [0], [1], [0, 0, 1, 1], [], []>} : vector<24x28xf32>, vector<28x240xf32>, vector<24x240xf32> -> vector<24x240xf32>
    %9 = arith.addf %3, %8 : vector<24x240xf32>
    %c0_9 = arith.constant 0 : index
    %c0_10 = arith.constant 0 : index
    %c1 = arith.constant 1 : index
    %c0_11 = arith.constant 0 : index
    %10 = vector.load %arg1[%c0_9, %c0_10, %c1, %c0_11] : memref<1x1x28x28xf32, #tpu.memory_space<vmem>>, vector<1x1x24x28xf32>
    %11 = vector.shape_cast %10 : vector<1x1x24x28xf32> to vector<24x28xf32>
    %c1_12 = arith.constant 1 : index
    %c0_13 = arith.constant 0 : index
    %c0_14 = arith.constant 0 : index
    %12 = vector.load %arg2[%c1_12, %c0_13, %c0_14] : memref<5x28x240xf32, #tpu.memory_space<vmem>>, vector<1x28x240xf32>
    %13 = vector.shape_cast %12 : vector<1x28x240xf32> to vector<28x240xf32>
    %cst_15 = arith.constant dense<0.000000e+00> : vector<24x240xf32>
    %14 = tpu.matmul %11, %13, %cst_15 {dimension_numbers = #tpu.dot_dimension_numbers<[1], [0], [0], [1], [0, 0, 1, 1], [], []>} : vector<24x28xf32>, vector<28x240xf32>, vector<24x240xf32> -> vector<24x240xf32>
    %15 = arith.addf %9, %14 : vector<24x240xf32>
    %c0_16 = arith.constant 0 : index
    %c0_17 = arith.constant 0 : index
    %c2 = arith.constant 2 : index
    %c0_18 = arith.constant 0 : index
    %16 = vector.load %arg1[%c0_16, %c0_17, %c2, %c0_18] : memref<1x1x28x28xf32, #tpu.memory_space<vmem>>, vector<1x1x24x28xf32>
    %17 = vector.shape_cast %16 : vector<1x1x24x28xf32> to vector<24x28xf32>
    %c2_19 = arith.constant 2 : index
    %c0_20 = arith.constant 0 : index
    %c0_21 = arith.constant 0 : index
    %18 = vector.load %arg2[%c2_19, %c0_20, %c0_21] : memref<5x28x240xf32, #tpu.memory_space<vmem>>, vector<1x28x240xf32>
    %19 = vector.shape_cast %18 : vector<1x28x240xf32> to vector<28x240xf32>
    %cst_22 = arith.constant dense<0.000000e+00> : vector<24x240xf32>
    %20 = tpu.matmul %17, %19, %cst_22 {dimension_numbers = #tpu.dot_dimension_numbers<[1], [0], [0], [1], [0, 0, 1, 1], [], []>} : vector<24x28xf32>, vector<28x240xf32>, vector<24x240xf32> -> vector<24x240xf32>
    %21 = arith.addf %15, %20 : vector<24x240xf32>
    %c0_23 = arith.constant 0 : index
    %c0_24 = arith.constant 0 : index
    %c3 = arith.constant 3 : index
    %c0_25 = arith.constant 0 : index
    %22 = vector.load %arg1[%c0_23, %c0_24, %c3, %c0_25] : memref<1x1x28x28xf32, #tpu.memory_space<vmem>>, vector<1x1x24x28xf32>
    %23 = vector.shape_cast %22 : vector<1x1x24x28xf32> to vector<24x28xf32>
    %c3_26 = arith.constant 3 : index
    %c0_27 = arith.constant 0 : index
    %c0_28 = arith.constant 0 : index
    %24 = vector.load %arg2[%c3_26, %c0_27, %c0_28] : memref<5x28x240xf32, #tpu.memory_space<vmem>>, vector<1x28x240xf32>
    %25 = vector.shape_cast %24 : vector<1x28x240xf32> to vector<28x240xf32>
    %cst_29 = arith.constant dense<0.000000e+00> : vector<24x240xf32>
    %26 = tpu.matmul %23, %25, %cst_29 {dimension_numbers = #tpu.dot_dimension_numbers<[1], [0], [0], [1], [0, 0, 1, 1], [], []>} : vector<24x28xf32>, vector<28x240xf32>, vector<24x240xf32> -> vector<24x240xf32>
    %27 = arith.addf %21, %26 : vector<24x240xf32>
    %c0_30 = arith.constant 0 : index
    %c0_31 = arith.constant 0 : index
    %c4 = arith.constant 4 : index
    %c0_32 = arith.constant 0 : index
    %28 = vector.load %arg1[%c0_30, %c0_31, %c4, %c0_32] : memref<1x1x28x28xf32, #tpu.memory_space<vmem>>, vector<1x1x24x28xf32>
    %29 = vector.shape_cast %28 : vector<1x1x24x28xf32> to vector<24x28xf32>
    %c4_33 = arith.constant 4 : index
    %c0_34 = arith.constant 0 : index
    %c0_35 = arith.constant 0 : index
    %30 = vector.load %arg2[%c4_33, %c0_34, %c0_35] : memref<5x28x240xf32, #tpu.memory_space<vmem>>, vector<1x28x240xf32>
    %31 = vector.shape_cast %30 : vector<1x28x240xf32> to vector<28x240xf32>
    %cst_36 = arith.constant dense<0.000000e+00> : vector<24x240xf32>
    %32 = tpu.matmul %29, %31, %cst_36 {dimension_numbers = #tpu.dot_dimension_numbers<[1], [0], [0], [1], [0, 0, 1, 1], [], []>} : vector<24x28xf32>, vector<28x240xf32>, vector<24x240xf32> -> vector<24x240xf32>
    %33 = arith.addf %27, %32 : vector<24x240xf32>
    %34 = vector.extract_strided_slice %33 {offsets = [0, 0], sizes = [23, 240], strides = [1, 1]} : vector<24x240xf32> to vector<23x240xf32>
    %35 = vector.extract_strided_slice %33 {offsets = [1, 0], sizes = [23, 240], strides = [1, 1]} : vector<24x240xf32> to vector<23x240xf32>
    %36 = arith.maximumf %34, %35 : vector<23x240xf32>
    %c0_37 = arith.constant 0 : index
    %c0_38 = arith.constant 0 : index
    %37 = vector.load %arg4[%c0_37, %c0_38] : memref<12x23xf32, #tpu.memory_space<vmem>>, vector<12x23xf32>
    %cst_39 = arith.constant dense<0.000000e+00> : vector<12x240xf32>
    %38 = tpu.matmul %37, %36, %cst_39 {dimension_numbers = #tpu.dot_dimension_numbers<[1], [0], [0], [1], [0, 0, 1, 1], [], []>} : vector<12x23xf32>, vector<23x240xf32>, vector<12x240xf32> -> vector<12x240xf32>
    %39 = vector.extract_strided_slice %38 {offsets = [0, 0], sizes = [12, 239], strides = [1, 1]} : vector<12x240xf32> to vector<12x239xf32>
    %40 = vector.extract_strided_slice %38 {offsets = [0, 1], sizes = [12, 239], strides = [1, 1]} : vector<12x240xf32> to vector<12x239xf32>
    %41 = arith.maximumf %39, %40 : vector<12x239xf32>
    %c0_40 = arith.constant 0 : index
    %c0_41 = arith.constant 0 : index
    %42 = vector.load %arg5[%c0_40, %c0_41] : memref<239x120xf32, #tpu.memory_space<vmem>>, vector<239x120xf32>
    %cst_42 = arith.constant dense<0.000000e+00> : vector<12x120xf32>
    %43 = tpu.matmul %41, %42, %cst_42 {dimension_numbers = #tpu.dot_dimension_numbers<[1], [0], [0], [1], [0, 0, 1, 1], [], []>} : vector<12x239xf32>, vector<239x120xf32>, vector<12x120xf32> -> vector<12x120xf32>
    %cst_43 = arith.constant 0.000000e+00 : f32
    %44 = vector.broadcast %cst_43 : f32 to vector<12x120xf32>
    %45 = arith.maximumf %43, %44 : vector<12x120xf32>
    %cst_44 = arith.constant 0.000000e+00 : f32
    %46 = vector.broadcast %cst_44 : f32 to vector<8x160xf32>
    %c0_45 = arith.constant 0 : index
    %c0_46 = arith.constant 0 : index
    %47 = vector.load %arg7[%c0_45, %c0_46] : memref<1x160xf32, #tpu.memory_space<vmem>>, vector<1x160xf32>
    %48 = vector.broadcast %47 : vector<1x160xf32> to vector<8x160xf32>
    %49 = arith.addf %46, %48 : vector<8x160xf32>
    %50 = vector.extract_strided_slice %45 {offsets = [0, 0], sizes = [8, 120], strides = [1, 1]} : vector<12x120xf32> to vector<8x120xf32>
    %c0_47 = arith.constant 0 : index
    %c0_48 = arith.constant 0 : index
    %c0_49 = arith.constant 0 : index
    %51 = vector.load %arg6[%c0_47, %c0_48, %c0_49] : memref<5x120x160xf32, #tpu.memory_space<vmem>>, vector<1x120x160xf32>
    %52 = vector.shape_cast %51 : vector<1x120x160xf32> to vector<120x160xf32>
    %cst_50 = arith.constant dense<0.000000e+00> : vector<8x160xf32>
    %53 = tpu.matmul %50, %52, %cst_50 {dimension_numbers = #tpu.dot_dimension_numbers<[1], [0], [0], [1], [0, 0, 1, 1], [], []>} : vector<8x120xf32>, vector<120x160xf32>, vector<8x160xf32> -> vector<8x160xf32>
    %54 = arith.addf %49, %53 : vector<8x160xf32>
    %55 = vector.extract_strided_slice %45 {offsets = [1, 0], sizes = [8, 120], strides = [1, 1]} : vector<12x120xf32> to vector<8x120xf32>
    %c1_51 = arith.constant 1 : index
    %c0_52 = arith.constant 0 : index
    %c0_53 = arith.constant 0 : index
    %56 = vector.load %arg6[%c1_51, %c0_52, %c0_53] : memref<5x120x160xf32, #tpu.memory_space<vmem>>, vector<1x120x160xf32>
    %57 = vector.shape_cast %56 : vector<1x120x160xf32> to vector<120x160xf32>
    %cst_54 = arith.constant dense<0.000000e+00> : vector<8x160xf32>
    %58 = tpu.matmul %55, %57, %cst_54 {dimension_numbers = #tpu.dot_dimension_numbers<[1], [0], [0], [1], [0, 0, 1, 1], [], []>} : vector<8x120xf32>, vector<120x160xf32>, vector<8x160xf32> -> vector<8x160xf32>
    %59 = arith.addf %54, %58 : vector<8x160xf32>
    %60 = vector.extract_strided_slice %45 {offsets = [2, 0], sizes = [8, 120], strides = [1, 1]} : vector<12x120xf32> to vector<8x120xf32>
    %c2_55 = arith.constant 2 : index
    %c0_56 = arith.constant 0 : index
    %c0_57 = arith.constant 0 : index
    %61 = vector.load %arg6[%c2_55, %c0_56, %c0_57] : memref<5x120x160xf32, #tpu.memory_space<vmem>>, vector<1x120x160xf32>
    %62 = vector.shape_cast %61 : vector<1x120x160xf32> to vector<120x160xf32>
    %cst_58 = arith.constant dense<0.000000e+00> : vector<8x160xf32>
    %63 = tpu.matmul %60, %62, %cst_58 {dimension_numbers = #tpu.dot_dimension_numbers<[1], [0], [0], [1], [0, 0, 1, 1], [], []>} : vector<8x120xf32>, vector<120x160xf32>, vector<8x160xf32> -> vector<8x160xf32>
    %64 = arith.addf %59, %63 : vector<8x160xf32>
    %65 = vector.extract_strided_slice %45 {offsets = [3, 0], sizes = [8, 120], strides = [1, 1]} : vector<12x120xf32> to vector<8x120xf32>
    %c3_59 = arith.constant 3 : index
    %c0_60 = arith.constant 0 : index
    %c0_61 = arith.constant 0 : index
    %66 = vector.load %arg6[%c3_59, %c0_60, %c0_61] : memref<5x120x160xf32, #tpu.memory_space<vmem>>, vector<1x120x160xf32>
    %67 = vector.shape_cast %66 : vector<1x120x160xf32> to vector<120x160xf32>
    %cst_62 = arith.constant dense<0.000000e+00> : vector<8x160xf32>
    %68 = tpu.matmul %65, %67, %cst_62 {dimension_numbers = #tpu.dot_dimension_numbers<[1], [0], [0], [1], [0, 0, 1, 1], [], []>} : vector<8x120xf32>, vector<120x160xf32>, vector<8x160xf32> -> vector<8x160xf32>
    %69 = arith.addf %64, %68 : vector<8x160xf32>
    %70 = vector.extract_strided_slice %45 {offsets = [4, 0], sizes = [8, 120], strides = [1, 1]} : vector<12x120xf32> to vector<8x120xf32>
    %c4_63 = arith.constant 4 : index
    %c0_64 = arith.constant 0 : index
    %c0_65 = arith.constant 0 : index
    %71 = vector.load %arg6[%c4_63, %c0_64, %c0_65] : memref<5x120x160xf32, #tpu.memory_space<vmem>>, vector<1x120x160xf32>
    %72 = vector.shape_cast %71 : vector<1x120x160xf32> to vector<120x160xf32>
    %cst_66 = arith.constant dense<0.000000e+00> : vector<8x160xf32>
    %73 = tpu.matmul %70, %72, %cst_66 {dimension_numbers = #tpu.dot_dimension_numbers<[1], [0], [0], [1], [0, 0, 1, 1], [], []>} : vector<8x120xf32>, vector<120x160xf32>, vector<8x160xf32> -> vector<8x160xf32>
    %74 = arith.addf %69, %73 : vector<8x160xf32>
    %75 = vector.extract_strided_slice %74 {offsets = [0, 0], sizes = [7, 160], strides = [1, 1]} : vector<8x160xf32> to vector<7x160xf32>
    %76 = vector.extract_strided_slice %74 {offsets = [1, 0], sizes = [7, 160], strides = [1, 1]} : vector<8x160xf32> to vector<7x160xf32>
    %77 = arith.maximumf %75, %76 : vector<7x160xf32>
    %c0_67 = arith.constant 0 : index
    %c0_68 = arith.constant 0 : index
    %78 = vector.load %arg8[%c0_67, %c0_68] : memref<4x7xf32, #tpu.memory_space<vmem>>, vector<4x7xf32>
    %cst_69 = arith.constant dense<0.000000e+00> : vector<4x160xf32>
    %79 = tpu.matmul %78, %77, %cst_69 {dimension_numbers = #tpu.dot_dimension_numbers<[1], [0], [0], [1], [0, 0, 1, 1], [], []>} : vector<4x7xf32>, vector<7x160xf32>, vector<4x160xf32> -> vector<4x160xf32>
    %80 = vector.extract_strided_slice %79 {offsets = [0, 0], sizes = [4, 159], strides = [1, 1]} : vector<4x160xf32> to vector<4x159xf32>
    %81 = vector.extract_strided_slice %79 {offsets = [0, 1], sizes = [4, 159], strides = [1, 1]} : vector<4x160xf32> to vector<4x159xf32>
    %82 = arith.maximumf %80, %81 : vector<4x159xf32>
    %c0_70 = arith.constant 0 : index
    %c0_71 = arith.constant 0 : index
    %83 = vector.load %arg9[%c0_70, %c0_71] : memref<159x80xf32, #tpu.memory_space<vmem>>, vector<159x80xf32>
    %cst_72 = arith.constant dense<0.000000e+00> : vector<4x80xf32>
    %84 = tpu.matmul %82, %83, %cst_72 {dimension_numbers = #tpu.dot_dimension_numbers<[1], [0], [0], [1], [0, 0, 1, 1], [], []>} : vector<4x159xf32>, vector<159x80xf32>, vector<4x80xf32> -> vector<4x80xf32>
    %cst_73 = arith.constant 0.000000e+00 : f32
    %85 = vector.broadcast %cst_73 : f32 to vector<4x80xf32>
    %86 = arith.maximumf %84, %85 : vector<4x80xf32>
    %cst_74 = arith.constant 0.000000e+00 : f32
    %87 = vector.broadcast %cst_74 : f32 to vector<1x50xf32>
    %88 = vector.extract_strided_slice %86 {offsets = [0, 0], sizes = [1, 80], strides = [1, 1]} : vector<4x80xf32> to vector<1x80xf32>
    %c0_75 = arith.constant 0 : index
    %c0_76 = arith.constant 0 : index
    %c0_77 = arith.constant 0 : index
    %89 = vector.load %arg10[%c0_75, %c0_76, %c0_77] : memref<4x80x50xf32, #tpu.memory_space<vmem>>, vector<1x80x50xf32>
    %90 = vector.shape_cast %89 : vector<1x80x50xf32> to vector<80x50xf32>
    %cst_78 = arith.constant dense<0.000000e+00> : vector<1x50xf32>
    %91 = tpu.matmul %88, %90, %cst_78 {dimension_numbers = #tpu.dot_dimension_numbers<[1], [0], [0], [1], [0, 0, 1, 1], [], []>} : vector<1x80xf32>, vector<80x50xf32>, vector<1x50xf32> -> vector<1x50xf32>
    %92 = arith.addf %87, %91 : vector<1x50xf32>
    %93 = vector.extract_strided_slice %86 {offsets = [1, 0], sizes = [1, 80], strides = [1, 1]} : vector<4x80xf32> to vector<1x80xf32>
    %c1_79 = arith.constant 1 : index
    %c0_80 = arith.constant 0 : index
    %c0_81 = arith.constant 0 : index
    %94 = vector.load %arg10[%c1_79, %c0_80, %c0_81] : memref<4x80x50xf32, #tpu.memory_space<vmem>>, vector<1x80x50xf32>
    %95 = vector.shape_cast %94 : vector<1x80x50xf32> to vector<80x50xf32>
    %cst_82 = arith.constant dense<0.000000e+00> : vector<1x50xf32>
    %96 = tpu.matmul %93, %95, %cst_82 {dimension_numbers = #tpu.dot_dimension_numbers<[1], [0], [0], [1], [0, 0, 1, 1], [], []>} : vector<1x80xf32>, vector<80x50xf32>, vector<1x50xf32> -> vector<1x50xf32>
    %97 = arith.addf %92, %96 : vector<1x50xf32>
    %98 = vector.extract_strided_slice %86 {offsets = [2, 0], sizes = [1, 80], strides = [1, 1]} : vector<4x80xf32> to vector<1x80xf32>
    %c2_83 = arith.constant 2 : index
    %c0_84 = arith.constant 0 : index
    %c0_85 = arith.constant 0 : index
    %99 = vector.load %arg10[%c2_83, %c0_84, %c0_85] : memref<4x80x50xf32, #tpu.memory_space<vmem>>, vector<1x80x50xf32>
    %100 = vector.shape_cast %99 : vector<1x80x50xf32> to vector<80x50xf32>
    %cst_86 = arith.constant dense<0.000000e+00> : vector<1x50xf32>
    %101 = tpu.matmul %98, %100, %cst_86 {dimension_numbers = #tpu.dot_dimension_numbers<[1], [0], [0], [1], [0, 0, 1, 1], [], []>} : vector<1x80xf32>, vector<80x50xf32>, vector<1x50xf32> -> vector<1x50xf32>
    %102 = arith.addf %97, %101 : vector<1x50xf32>
    %103 = vector.extract_strided_slice %86 {offsets = [3, 0], sizes = [1, 80], strides = [1, 1]} : vector<4x80xf32> to vector<1x80xf32>
    %c3_87 = arith.constant 3 : index
    %c0_88 = arith.constant 0 : index
    %c0_89 = arith.constant 0 : index
    %104 = vector.load %arg10[%c3_87, %c0_88, %c0_89] : memref<4x80x50xf32, #tpu.memory_space<vmem>>, vector<1x80x50xf32>
    %105 = vector.shape_cast %104 : vector<1x80x50xf32> to vector<80x50xf32>
    %cst_90 = arith.constant dense<0.000000e+00> : vector<1x50xf32>
    %106 = tpu.matmul %103, %105, %cst_90 {dimension_numbers = #tpu.dot_dimension_numbers<[1], [0], [0], [1], [0, 0, 1, 1], [], []>} : vector<1x80xf32>, vector<80x50xf32>, vector<1x50xf32> -> vector<1x50xf32>
    %107 = arith.addf %102, %106 : vector<1x50xf32>
    %c0_91 = arith.constant 0 : index
    %c0_92 = arith.constant 0 : index
    %108 = vector.load %arg11[%c0_91, %c0_92] : memref<1x50xf32, #tpu.memory_space<vmem>>, vector<1x50xf32>
    %109 = arith.addf %107, %108 : vector<1x50xf32>
    %cst_93 = arith.constant 0.000000e+00 : f32
    %110 = vector.broadcast %cst_93 : f32 to vector<1x50xf32>
    %111 = arith.maximumf %109, %110 : vector<1x50xf32>
    %c0_94 = arith.constant 0 : index
    %c0_95 = arith.constant 0 : index
    %112 = vector.load %arg12[%c0_94, %c0_95] : memref<50x36xf32, #tpu.memory_space<vmem>>, vector<50x36xf32>
    %cst_96 = arith.constant dense<0.000000e+00> : vector<1x36xf32>
    %113 = tpu.matmul %111, %112, %cst_96 {dimension_numbers = #tpu.dot_dimension_numbers<[1], [0], [0], [1], [0, 0, 1, 1], [], []>} : vector<1x50xf32>, vector<50x36xf32>, vector<1x36xf32> -> vector<1x36xf32>
    %c0_97 = arith.constant 0 : index
    %c0_98 = arith.constant 0 : index
    %114 = vector.load %arg13[%c0_97, %c0_98] : memref<1x36xf32, #tpu.memory_space<vmem>>, vector<1x36xf32>
    %115 = arith.addf %113, %114 : vector<1x36xf32>
    %c0_99 = arith.constant 0 : index
    %c0_100 = arith.constant 0 : index
    %c0_101 = arith.constant 0 : index
    %116 = vector.load %arg14[%c0_99, %c0_100, %c0_101] : memref<1x1x36xf32, #tpu.memory_space<vmem>>, vector<1x1x36xf32>
    %117 = vector.shape_cast %116 : vector<1x1x36xf32> to vector<1x36xf32>
    %118 = vector.shape_cast %115 : vector<1x36xf32> to vector<1x1x36xf32>
    tpu.vector_store %arg14[%c0_99, %c0_100, %c0_101], %118 {strides = array<i32>} : memref<1x1x36xf32, #tpu.memory_space<vmem>>, vector<1x1x36xf32>,
    return
  }
  func.func @transform_0(%arg0: i32) -> (i32, i32, i32, i32) {
    %c0_i32 = arith.constant 0 : i32
    %c0_i32_0 = arith.constant 0 : i32
    %c0_i32_1 = arith.constant 0 : i32
    %c0_i32_2 = arith.constant 0 : i32
    return %arg0, %c0_i32, %c0_i32_0, %c0_i32_1 : i32, i32, i32, i32
  }
  func.func @transform_1(%arg0: i32) -> (i32, i32, i32) {
    %c0_i32 = arith.constant 0 : i32
    %c0_i32_0 = arith.constant 0 : i32
    %c0_i32_1 = arith.constant 0 : i32
    %c0_i32_2 = arith.constant 0 : i32
    return %c0_i32, %c0_i32_0, %c0_i32_1 : i32, i32, i32
  }
  func.func @transform_2(%arg0: i32) -> (i32, i32) {
    %c0_i32 = arith.constant 0 : i32
    %c0_i32_0 = arith.constant 0 : i32
    %c0_i32_1 = arith.constant 0 : i32
    return %c0_i32, %c0_i32_0 : i32, i32
  }
  func.func @transform_3(%arg0: i32) -> (i32, i32) {
    %c0_i32 = arith.constant 0 : i32
    %c0_i32_0 = arith.constant 0 : i32
    %c0_i32_1 = arith.constant 0 : i32
    return %c0_i32, %c0_i32_0 : i32, i32
  }
  func.func @transform_4(%arg0: i32) -> (i32, i32) {
    %c0_i32 = arith.constant 0 : i32
    %c0_i32_0 = arith.constant 0 : i32
    %c0_i32_1 = arith.constant 0 : i32
    return %c0_i32, %c0_i32_0 : i32, i32
  }
  func.func @transform_5(%arg0: i32) -> (i32, i32, i32) {
    %c0_i32 = arith.constant 0 : i32
    %c0_i32_0 = arith.constant 0 : i32
    %c0_i32_1 = arith.constant 0 : i32
    %c0_i32_2 = arith.constant 0 : i32
    return %c0_i32, %c0_i32_0, %c0_i32_1 : i32, i32, i32
  }
  func.func @transform_6(%arg0: i32) -> (i32, i32) {
    %c0_i32 = arith.constant 0 : i32
    %c0_i32_0 = arith.constant 0 : i32
    %c0_i32_1 = arith.constant 0 : i32
    return %c0_i32, %c0_i32_0 : i32, i32
  }
  func.func @transform_7(%arg0: i32) -> (i32, i32) {
    %c0_i32 = arith.constant 0 : i32
    %c0_i32_0 = arith.constant 0 : i32
    %c0_i32_1 = arith.constant 0 : i32
    return %c0_i32, %c0_i32_0 : i32, i32
  }
  func.func @transform_8(%arg0: i32) -> (i32, i32) {
    %c0_i32 = arith.constant 0 : i32
    %c0_i32_0 = arith.constant 0 : i32
    %c0_i32_1 = arith.constant 0 : i32
    return %c0_i32, %c0_i32_0 : i32, i32
  }
  func.func @transform_9(%arg0: i32) -> (i32, i32, i32) {
    %c0_i32 = arith.constant 0 : i32
    %c0_i32_0 = arith.constant 0 : i32
    %c0_i32_1 = arith.constant 0 : i32
    %c0_i32_2 = arith.constant 0 : i32
    return %c0_i32, %c0_i32_0, %c0_i32_1 : i32, i32, i32
  }
  func.func @transform_10(%arg0: i32) -> (i32, i32) {
    %c0_i32 = arith.constant 0 : i32
    %c0_i32_0 = arith.constant 0 : i32
    %c0_i32_1 = arith.constant 0 : i32
    return %c0_i32, %c0_i32_0 : i32, i32
  }
  func.func @transform_11(%arg0: i32) -> (i32, i32) {
    %c0_i32 = arith.constant 0 : i32
    %c0_i32_0 = arith.constant 0 : i32
    %c0_i32_1 = arith.constant 0 : i32
    return %c0_i32, %c0_i32_0 : i32, i32
  }
  func.func @transform_12(%arg0: i32) -> (i32, i32) {
    %c0_i32 = arith.constant 0 : i32
    %c0_i32_0 = arith.constant 0 : i32
    %c0_i32_1 = arith.constant 0 : i32
    return %c0_i32, %c0_i32_0 : i32, i32
  }
  func.func @transform_13(%arg0: i32) -> (i32, i32, i32) {
    %c0_i32 = arith.constant 0 : i32
    %c0_i32_0 = arith.constant 0 : i32
    %c0_i32_1 = arith.constant 0 : i32
    return %arg0, %c0_i32, %c0_i32_0 : i32, i32, i32
  }
}

</mosaic_0001>

<llo_original>
// kernel: tpu_custom_call.1
$region0: #{tpu_custom_call.1}
  #allocation0 [shape = 'u32[]', space=smem, size = 0x4, offset = 0x4, fixed_abs, tag = 'smem constant byte address 0x4 - core index']
  #allocation1 [shape = 'u32[144,128]{1,0:T(1,128)}', space=vmem, size = 0x12000, scoped, tag = 'internal scratch']
  %s0 = inlined_call_operand.vmem [shape: f32[2,1,28,28], index: 0, kind: input, shape index: {}]
  %s1 = inlined_call_operand.vmem [shape: f32[5,28,240], index: 1, kind: input, shape index: {}]
  %s2 = inlined_call_operand.vmem [shape: f32[1,240], index: 2, kind: input, shape index: {}]
  %s3 = inlined_call_operand.vmem [shape: f32[12,23], index: 3, kind: input, shape index: {}]
  %s4 = inlined_call_operand.vmem [shape: f32[239,120], index: 4, kind: input, shape index: {}]
  %s5 = inlined_call_operand.vmem [shape: f32[5,120,160], index: 5, kind: input, shape index: {}]
  %s6 = inlined_call_operand.vmem [shape: f32[1,160], index: 6, kind: input, shape index: {}]
  %s7 = inlined_call_operand.vmem [shape: f32[4,7], index: 7, kind: input, shape index: {}]
  %s8 = inlined_call_operand.vmem [shape: f32[159,80], index: 8, kind: input, shape index: {}]
  %s9 = inlined_call_operand.vmem [shape: f32[4,80,50], index: 9, kind: input, shape index: {}]
  %s10 = inlined_call_operand.vmem [shape: f32[1,50], index: 10, kind: input, shape index: {}]
  %s11 = inlined_call_operand.vmem [shape: f32[50,36], index: 11, kind: input, shape index: {}]
  %s12 = inlined_call_operand.vmem [shape: f32[1,36], index: 12, kind: input, shape index: {}]
  %s13 = inlined_call_operand.hbm [shape: f32[2,1,36], index: 13, kind: output, shape index: {}]
  %s14 = sld [smem:[#allocation0]]
  $region85: #{tpu_custom_call.1} parent=0
    _
  %s16 = ssub.s32 1, %s14
  %s17 = scalar_select 0, %s16, %s14
  $region1: #{tpu_custom_call.1} parent=0
    #allocation2 [shape = 'u8[1024]{0}', space=vmem, size = 0x400, scoped, tag = 'output window, operand 0']
    #allocation3 [shape = 's32[2]{0}', space=sflag, size = 0x8, scoped, tag = 'scoped memory for tpu_custom_call.1']
    %18 = vsyncpa [#allocation3], 0
    %s19 = scalar_lea.sflag [#allocation3], 1
    %20 = vsyncpa %s19, 0
    loop: start=0, step=1, limit=4
    $region2: #{tpu_custom_call.1} parent=1 // loop_pre_header
      _
    $region3: #{tpu_custom_call.1} parent=1 // loop_header
      %s22 = sphi 0, %s26
      %p23 = scmp.ge.s32.totalorder %s22, 4
      %s32 = sphi 0, %s34
      %s35 = sphi 0, %s32
      %s36 = sphi 0, %s35
      %s52 = sphi 0, %s36
      %s56 = sphi 0, %s56
      %s58 = sphi 0, %s56
      %s59 = sphi 0, %s58
      %s73 = sphi 0, %s59
      %s77 = sphi 0, %s77
      %s79 = sphi 0, %s77
      %s80 = sphi 0, %s79
      %s94 = sphi 0, %s80
      %s98 = sphi 0, %s98
      %s100 = sphi 0, %s98
      %s101 = sphi 0, %s100
      %s115 = sphi 0, %s101
      %s119 = sphi 0, %s119
      %s121 = sphi 0, %s119
      %s122 = sphi 0, %s121
      %s136 = sphi 0, %s122
      %s140 = sphi 0, %s140
      %s142 = sphi 0, %s140
      %s143 = sphi 0, %s142
      %s157 = sphi 0, %s143
      %s161 = sphi 0, %s161
      %s163 = sphi 0, %s161
      %s164 = sphi 0, %s163
      %s178 = sphi 0, %s164
      %s182 = sphi 0, %s182
      %s184 = sphi 0, %s182
      %s185 = sphi 0, %s184
      %s199 = sphi 0, %s185
      %s203 = sphi 0, %s203
      %s205 = sphi 0, %s203
      %s206 = sphi 0, %s205
      %s220 = sphi 0, %s206
      %s224 = sphi 0, %s224
      %s226 = sphi 0, %s224
      %s227 = sphi 0, %s226
      %s241 = sphi 0, %s227
      %s245 = sphi 0, %s245
      %s247 = sphi 0, %s245
      %s248 = sphi 0, %s247
      %s262 = sphi 0, %s248
      %s266 = sphi 0, %s266
      %s268 = sphi 0, %s266
      %s269 = sphi 0, %s268
      %s283 = sphi 0, %s269
      %s287 = sphi 0, %s287
      %s289 = sphi 0, %s287
      %s290 = sphi 0, %s289
      %s304 = sphi 0, %s290
      %s310 = sphi 0, %s312
      %s313 = sphi 0, %s310
      %s314 = sphi 0, %s313
      %s330 = sphi 0, %s314
    $region4: #{tpu_custom_call.1} parent=1 // loop_header_branch
      %25 = sbr.rel (%p23) target = $region8
    $region5: #{tpu_custom_call.1} parent=1 // loop_body
      %s27 = ssub.s32 %s22, 1
      %s28 = ssub.s32 %s22, 2
      %s29 = sadd.s32 %s22, 1
      %s30 = ssub.s32 %s22, %s29
      %p31 = scmp.eq.s32.totalorder %s30, 0
      %s33 = sadd.s32 %s32, 1
      %s34 = scalar_select %p31, %s32, %s33
      %p37 = pneg %p31
      %p38 = scmp.eq.s32.totalorder %s22, 1
      %p39 = por %p37, %p38
      %p40 = scmp.ne.s32.totalorder %s32, %s35
      %p41 = scmp.eq.s32.totalorder %s22, 0
      %p42 = por %p40, %p41
      %p43 = scmp.ne.s32.totalorder %s32, %s35
      %p44 = scmp.eq.s32.totalorder %s27, 1
      %p45 = por %p43, %p44
      %p46 = scmp.ne.s32.totalorder %s35, %s36
      %p47 = scmp.eq.s32.totalorder %s27, 0
      %p48 = por %p46, %p47
      %p49 = scmp.ne.s32.totalorder %s35, %s36
      %p50 = scmp.eq.s32.totalorder %s28, 1
      %p51 = por %p49, %p50
      %p53 = scmp.ne.s32.totalorder %s36, %s52
      %p54 = scmp.eq.s32.totalorder %s28, 0
      %p55 = por %p53, %p54
      %s57 = sadd.s32 %s56, 1
      %p60 = scmp.eq.s32.totalorder %s22, 1
      %p61 = scmp.ne.s32.totalorder %s56, %s58
      %p62 = scmp.eq.s32.totalorder %s22, 0
      %p63 = por %p61, %p62
      %p64 = scmp.ne.s32.totalorder %s56, %s58
      %p65 = scmp.eq.s32.totalorder %s27, 1
      %p66 = por %p64, %p65
      %p67 = scmp.ne.s32.totalorder %s58, %s59
      %p68 = scmp.eq.s32.totalorder %s27, 0
      %p69 = por %p67, %p68
      %p70 = scmp.ne.s32.totalorder %s58, %s59
      %p71 = scmp.eq.s32.totalorder %s28, 1
      %p72 = por %p70, %p71
      %p74 = scmp.ne.s32.totalorder %s59, %s73
      %p75 = scmp.eq.s32.totalorder %s28, 0
      %p76 = por %p74, %p75
      %s78 = sadd.s32 %s77, 1
      %p81 = scmp.eq.s32.totalorder %s22, 1
      %p82 = scmp.ne.s32.totalorder %s77, %s79
      %p83 = scmp.eq.s32.totalorder %s22, 0
      %p84 = por %p82, %p83
      %p85 = scmp.ne.s32.totalorder %s77, %s79
      %p86 = scmp.eq.s32.totalorder %s27, 1
      %p87 = por %p85, %p86
      %p88 = scmp.ne.s32.totalorder %s79, %s80
      %p89 = scmp.eq.s32.totalorder %s27, 0
      %p90 = por %p88, %p89
      %p91 = scmp.ne.s32.totalorder %s79, %s80
      %p92 = scmp.eq.s32.totalorder %s28, 1
      %p93 = por %p91, %p92
      %p95 = scmp.ne.s32.totalorder %s80, %s94
      %p96 = scmp.eq.s32.totalorder %s28, 0
      %p97 = por %p95, %p96
      %s99 = sadd.s32 %s98, 1
      %p102 = scmp.eq.s32.totalorder %s22, 1
      %p103 = scmp.ne.s32.totalorder %s98, %s100
      %p104 = scmp.eq.s32.totalorder %s22, 0
      %p105 = por %p103, %p104
      %p106 = scmp.ne.s32.totalorder %s98, %s100
      %p107 = scmp.eq.s32.totalorder %s27, 1
      %p108 = por %p106, %p107
      %p109 = scmp.ne.s32.totalorder %s100, %s101
      %p110 = scmp.eq.s32.totalorder %s27, 0
      %p111 = por %p109, %p110
      %p112 = scmp.ne.s32.totalorder %s100, %s101
      %p113 = scmp.eq.s32.totalorder %s28, 1
      %p114 = por %p112, %p113
      %p116 = scmp.ne.s32.totalorder %s101, %s115
      %p117 = scmp.eq.s32.totalorder %s28, 0
      %p118 = por %p116, %p117
      %s120 = sadd.s32 %s119, 1
      %p123 = scmp.eq.s32.totalorder %s22, 1
      %p124 = scmp.ne.s32.totalorder %s119, %s121
      %p125 = scmp.eq.s32.totalorder %s22, 0
      %p126 = por %p124, %p125
      %p127 = scmp.ne.s32.totalorder %s119, %s121
      %p128 = scmp.eq.s32.totalorder %s27, 1
      %p129 = por %p127, %p128
      %p130 = scmp.ne.s32.totalorder %s121, %s122
      %p131 = scmp.eq.s32.totalorder %s27, 0
      %p132 = por %p130, %p131
      %p133 = scmp.ne.s32.totalorder %s121, %s122
      %p134 = scmp.eq.s32.totalorder %s28, 1
      %p135 = por %p133, %p134
      %p137 = scmp.ne.s32.totalorder %s122, %s136
      %p138 = scmp.eq.s32.totalorder %s28, 0
      %p139 = por %p137, %p138
      %s141 = sadd.s32 %s140, 1
      %p144 = scmp.eq.s32.totalorder %s22, 1
      %p145 = scmp.ne.s32.totalorder %s140, %s142
      %p146 = scmp.eq.s32.totalorder %s22, 0
      %p147 = por %p145, %p146
      %p148 = scmp.ne.s32.totalorder %s140, %s142
      %p149 = scmp.eq.s32.totalorder %s27, 1
      %p150 = por %p148, %p149
      %p151 = scmp.ne.s32.totalorder %s142, %s143
      %p152 = scmp.eq.s32.totalorder %s27, 0
      %p153 = por %p151, %p152
      %p154 = scmp.ne.s32.totalorder %s142, %s143
      %p155 = scmp.eq.s32.totalorder %s28, 1
      %p156 = por %p154, %p155
      %p158 = scmp.ne.s32.totalorder %s143, %s157
      %p159 = scmp.eq.s32.totalorder %s28, 0
      %p160 = por %p158, %p159
      %s162 = sadd.s32 %s161, 1
      %p165 = scmp.eq.s32.totalorder %s22, 1
      %p166 = scmp.ne.s32.totalorder %s161, %s163
      %p167 = scmp.eq.s32.totalorder %s22, 0
      %p168 = por %p166, %p167
      %p169 = scmp.ne.s32.totalorder %s161, %s163
      %p170 = scmp.eq.s32.totalorder %s27, 1
      %p171 = por %p169, %p170
      %p172 = scmp.ne.s32.totalorder %s163, %s164
      %p173 = scmp.eq.s32.totalorder %s27, 0
      %p174 = por %p172, %p173
      %p175 = scmp.ne.s32.totalorder %s163, %s164
      %p176 = scmp.eq.s32.totalorder %s28, 1
      %p177 = por %p175, %p176
      %p179 = scmp.ne.s32.totalorder %s164, %s178
      %p180 = scmp.eq.s32.totalorder %s28, 0
      %p181 = por %p179, %p180
      %s183 = sadd.s32 %s182, 1
      %p186 = scmp.eq.s32.totalorder %s22, 1
      %p187 = scmp.ne.s32.totalorder %s182, %s184
      %p188 = scmp.eq.s32.totalorder %s22, 0
      %p189 = por %p187, %p188
      %p190 = scmp.ne.s32.totalorder %s182, %s184
      %p191 = scmp.eq.s32.totalorder %s27, 1
      %p192 = por %p190, %p191
      %p193 = scmp.ne.s32.totalorder %s184, %s185
      %p194 = scmp.eq.s32.totalorder %s27, 0
      %p195 = por %p193, %p194
      %p196 = scmp.ne.s32.totalorder %s184, %s185
      %p197 = scmp.eq.s32.totalorder %s28, 1
      %p198 = por %p196, %p197
      %p200 = scmp.ne.s32.totalorder %s185, %s199
      %p201 = scmp.eq.s32.totalorder %s28, 0
      %p202 = por %p200, %p201
      %s204 = sadd.s32 %s203, 1
      %p207 = scmp.eq.s32.totalorder %s22, 1
      %p208 = scmp.ne.s32.totalorder %s203, %s205
      %p209 = scmp.eq.s32.totalorder %s22, 0
      %p210 = por %p208, %p209
      %p211 = scmp.ne.s32.totalorder %s203, %s205
      %p212 = scmp.eq.s32.totalorder %s27, 1
      %p213 = por %p211, %p212
      %p214 = scmp.ne.s32.totalorder %s205, %s206
      %p215 = scmp.eq.s32.totalorder %s27, 0
      %p216 = por %p214, %p215
      %p217 = scmp.ne.s32.totalorder %s205, %s206
      %p218 = scmp.eq.s32.totalorder %s28, 1
      %p219 = por %p217, %p218
      %p221 = scmp.ne.s32.totalorder %s206, %s220
      %p222 = scmp.eq.s32.totalorder %s28, 0
      %p223 = por %p221, %p222
      %s225 = sadd.s32 %s224, 1
      %p228 = scmp.eq.s32.totalorder %s22, 1
      %p229 = scmp.ne.s32.totalorder %s224, %s226
      %p230 = scmp.eq.s32.totalorder %s22, 0
      %p231 = por %p229, %p230
      %p232 = scmp.ne.s32.totalorder %s224, %s226
      %p233 = scmp.eq.s32.totalorder %s27, 1
      %p234 = por %p232, %p233
      %p235 = scmp.ne.s32.totalorder %s226, %s227
      %p236 = scmp.eq.s32.totalorder %s27, 0
      %p237 = por %p235, %p236
      %p238 = scmp.ne.s32.totalorder %s226, %s227
      %p239 = scmp.eq.s32.totalorder %s28, 1
      %p240 = por %p238, %p239
      %p242 = scmp.ne.s32.totalorder %s227, %s241
      %p243 = scmp.eq.s32.totalorder %s28, 0
      %p244 = por %p242, %p243
      %s246 = sadd.s32 %s245, 1
      %p249 = scmp.eq.s32.totalorder %s22, 1
      %p250 = scmp.ne.s32.totalorder %s245, %s247
      %p251 = scmp.eq.s32.totalorder %s22, 0
      %p252 = por %p250, %p251
      %p253 = scmp.ne.s32.totalorder %s245, %s247
      %p254 = scmp.eq.s32.totalorder %s27, 1
      %p255 = por %p253, %p254
      %p256 = scmp.ne.s32.totalorder %s247, %s248
      %p257 = scmp.eq.s32.totalorder %s27, 0
      %p258 = por %p256, %p257
      %p259 = scmp.ne.s32.totalorder %s247, %s248
      %p260 = scmp.eq.s32.totalorder %s28, 1
      %p261 = por %p259, %p260
      %p263 = scmp.ne.s32.totalorder %s248, %s262
      %p264 = scmp.eq.s32.totalorder %s28, 0
      %p265 = por %p263, %p264
      %s267 = sadd.s32 %s266, 1
      %p270 = scmp.eq.s32.totalorder %s22, 1
      %p271 = scmp.ne.s32.totalorder %s266, %s268
      %p272 = scmp.eq.s32.totalorder %s22, 0
      %p273 = por %p271, %p272
      %p274 = scmp.ne.s32.totalorder %s266, %s268
      %p275 = scmp.eq.s32.totalorder %s27, 1
      %p276 = por %p274, %p275
      %p277 = scmp.ne.s32.totalorder %s268, %s269
      %p278 = scmp.eq.s32.totalorder %s27, 0
      %p279 = por %p277, %p278
      %p280 = scmp.ne.s32.totalorder %s268, %s269
      %p281 = scmp.eq.s32.totalorder %s28, 1
      %p282 = por %p280, %p281
      %p284 = scmp.ne.s32.totalorder %s269, %s283
      %p285 = scmp.eq.s32.totalorder %s28, 0
      %p286 = por %p284, %p285
      %s288 = sadd.s32 %s287, 1
      %p291 = scmp.eq.s32.totalorder %s22, 1
      %p292 = scmp.ne.s32.totalorder %s287, %s289
      %p293 = scmp.eq.s32.totalorder %s22, 0
      %p294 = por %p292, %p293
      %p295 = scmp.ne.s32.totalorder %s287, %s289
      %p296 = scmp.eq.s32.totalorder %s27, 1
      %p297 = por %p295, %p296
      %p298 = scmp.ne.s32.totalorder %s289, %s290
      %p299 = scmp.eq.s32.totalorder %s27, 0
      %p300 = por %p298, %p299
      %p301 = scmp.ne.s32.totalorder %s289, %s290
      %p302 = scmp.eq.s32.totalorder %s28, 1
      %p303 = por %p301, %p302
      %p305 = scmp.ne.s32.totalorder %s290, %s304
      %p306 = scmp.eq.s32.totalorder %s28, 0
      %p307 = por %p305, %p306
      %s308 = ssub.s32 %s22, %s29
      %p309 = scmp.eq.s32.totalorder %s308, 0
      %s311 = sadd.s32 %s310, 1
      %s312 = scalar_select %p309, %s310, %s311
      %p315 = pneg %p309
      %p316 = scmp.eq.s32.totalorder %s22, 1
      %p317 = por %p315, %p316
      %p318 = scmp.ne.s32.totalorder %s310, %s313
      %p319 = scmp.eq.s32.totalorder %s22, 0
      %p320 = por %p318, %p319
      %p321 = scmp.ne.s32.totalorder %s310, %s313
      %p322 = scmp.eq.s32.totalorder %s27, 1
      %p323 = por %p321, %p322
      %p324 = scmp.ne.s32.totalorder %s313, %s314
      %p325 = scmp.eq.s32.totalorder %s27, 0
      %p326 = por %p324, %p325
      %p327 = scmp.ne.s32.totalorder %s313, %s314
      %p328 = scmp.eq.s32.totalorder %s28, 1
      %p329 = por %p327, %p328
      %p331 = scmp.ne.s32.totalorder %s314, %s330
      %p332 = scmp.eq.s32.totalorder %s28, 0
      %p333 = por %p331, %p332
      %p334 = scmp.le.s32.totalorder 1, %s22
      %p335 = scmp.lt.s32.totalorder %s22, 3
      %p336 = pnand %p334, %p335
      %p337 = pneg %p336
      // Predicated region
      $region9: #{tpu_custom_call.1} parent=5 // pred_check
        _
      $region10: #{tpu_custom_call.1} parent=5 // pred_check_branch
        %339 = sbr.rel (%p336) target = $region12
      $region11: #{tpu_custom_call.1} parent=5 // pred_region
        %s340 = ssub.s32 %s22, 1
        // Predicated region
        $region13: #{tpu_custom_call.1} parent=11 // pred_check
          %p341 = pneg %p69
        $region14: #{tpu_custom_call.1} parent=11 // pred_check_branch
          %343 = sbr.rel (%p341) target = $region16
        $region15: #{tpu_custom_call.1} parent=11 // pred_region
          _
        $region16: #{tpu_custom_call.1} parent=11 // pred_fallthru
          _
        // Predicated region
        $region17: #{tpu_custom_call.1} parent=11 // pred_check
          %p344 = pneg %p90
        $region18: #{tpu_custom_call.1} parent=11 // pred_check_branch
          %346 = sbr.rel (%p344) target = $region20
        $region19: #{tpu_custom_call.1} parent=11 // pred_region
          _
        $region20: #{tpu_custom_call.1} parent=11 // pred_fallthru
          _
        // Predicated region
        $region21: #{tpu_custom_call.1} parent=11 // pred_check
          %p347 = pneg %p111
        $region22: #{tpu_custom_call.1} parent=11 // pred_check_branch
          %349 = sbr.rel (%p347) target = $region24
        $region23: #{tpu_custom_call.1} parent=11 // pred_region
          _
        $region24: #{tpu_custom_call.1} parent=11 // pred_fallthru
          _
        // Predicated region
        $region25: #{tpu_custom_call.1} parent=11 // pred_check
          %p350 = pneg %p132
        $region26: #{tpu_custom_call.1} parent=11 // pred_check_branch
          %352 = sbr.rel (%p350) target = $region28
        $region27: #{tpu_custom_call.1} parent=11 // pred_region
          _
        $region28: #{tpu_custom_call.1} parent=11 // pred_fallthru
          _
        // Predicated region
        $region29: #{tpu_custom_call.1} parent=11 // pred_check
          %p353 = pneg %p153
        $region30: #{tpu_custom_call.1} parent=11 // pred_check_branch
          %355 = sbr.rel (%p353) target = $region32
        $region31: #{tpu_custom_call.1} parent=11 // pred_region
          _
        $region32: #{tpu_custom_call.1} parent=11 // pred_fallthru
          _
        // Predicated region
        $region33: #{tpu_custom_call.1} parent=11 // pred_check
          %p356 = pneg %p174
        $region34: #{tpu_custom_call.1} parent=11 // pred_check_branch
          %358 = sbr.rel (%p356) target = $region36
        $region35: #{tpu_custom_call.1} parent=11 // pred_region
          _
        $region36: #{tpu_custom_call.1} parent=11 // pred_fallthru
          _
        // Predicated region
        $region37: #{tpu_custom_call.1} parent=11 // pred_check
          %p359 = pneg %p195
        $region38: #{tpu_custom_call.1} parent=11 // pred_check_branch
          %361 = sbr.rel (%p359) target = $region40
        $region39: #{tpu_custom_call.1} parent=11 // pred_region
          _
        $region40: #{tpu_custom_call.1} parent=11 // pred_fallthru
          _
        // Predicated region
        $region41: #{tpu_custom_call.1} parent=11 // pred_check
          %p362 = pneg %p216
        $region42: #{tpu_custom_call.1} parent=11 // pred_check_branch
          %364 = sbr.rel (%p362) target = $region44
        $region43: #{tpu_custom_call.1} parent=11 // pred_region
          _
        $region44: #{tpu_custom_call.1} parent=11 // pred_fallthru
          _
        // Predicated region
        $region45: #{tpu_custom_call.1} parent=11 // pred_check
          %p365 = pneg %p237
        $region46: #{tpu_custom_call.1} parent=11 // pred_check_branch
          %367 = sbr.rel (%p365) target = $region48
        $region47: #{tpu_custom_call.1} parent=11 // pred_region
          _
        $region48: #{tpu_custom_call.1} parent=11 // pred_fallthru
          _
        // Predicated region
        $region49: #{tpu_custom_call.1} parent=11 // pred_check
          %p368 = pneg %p258
        $region50: #{tpu_custom_call.1} parent=11 // pred_check_branch
          %370 = sbr.rel (%p368) target = $region52
        $region51: #{tpu_custom_call.1} parent=11 // pred_region
          _
        $region52: #{tpu_custom_call.1} parent=11 // pred_fallthru
          _
        // Predicated region
        $region53: #{tpu_custom_call.1} parent=11 // pred_check
          %p371 = pneg %p279
        $region54: #{tpu_custom_call.1} parent=11 // pred_check_branch
          %373 = sbr.rel (%p371) target = $region56
        $region55: #{tpu_custom_call.1} parent=11 // pred_region
          _
        $region56: #{tpu_custom_call.1} parent=11 // pred_fallthru
          _
        // Predicated region
        $region57: #{tpu_custom_call.1} parent=11 // pred_check
          %p374 = pneg %p300
        $region58: #{tpu_custom_call.1} parent=11 // pred_check_branch
          %376 = sbr.rel (%p374) target = $region60
        $region59: #{tpu_custom_call.1} parent=11 // pred_region
          _
        $region60: #{tpu_custom_call.1} parent=11 // pred_fallthru
          _
      $region12: #{tpu_custom_call.1} parent=5 // pred_fallthru
        _
      %p377 = scmp.lt.s32.totalorder %s22, 2
      // Predicated region
      $region61: #{tpu_custom_call.1} parent=5 // pred_check
        %p378 = pneg %p377
      $region62: #{tpu_custom_call.1} parent=5 // pred_check_branch
        %380 = sbr.rel (%p378) target = $region64
      $region63: #{tpu_custom_call.1} parent=5 // pred_region
        // Predicated region
        $region65: #{tpu_custom_call.1} parent=63 // pred_check
          %p381 = pneg %p42
        $region66: #{tpu_custom_call.1} parent=63 // pred_check_branch
          %383 = sbr.rel (%p381) target = $region68
        $region67: #{tpu_custom_call.1} parent=63 // pred_region
          %p384 = scmp.lt.s32.totalorder %s22, 1
          %s385 = scalar_select %p384, %s22, 1
          %s386 = smul.addr %s385, 4
          %s387 = smul.addr %s386, 8
          %s388 = scalar_lea.vmem %s0, %s387
        $region68: #{tpu_custom_call.1} parent=63 // pred_fallthru
          _
      $region64: #{tpu_custom_call.1} parent=5 // pred_fallthru
        _
      %p389 = scmp.le.s32.totalorder 1, %s22
      %p390 = scmp.lt.s32.totalorder %s22, 3
      %p391 = pnand %p389, %p390
      %p392 = pneg %p391
      // Predicated region
      $region69: #{tpu_custom_call.1} parent=5 // pred_check
        _
      $region70: #{tpu_custom_call.1} parent=5 // pred_check_branch
        %394 = sbr.rel (%p391) target = $region72
      $region71: #{tpu_custom_call.1} parent=5 // pred_region
        %s395 = ssub.s32 %s22, 1
        %p396 = scmp.lt.s32.totalorder %s27, 1
        %s397 = scalar_select %p396, %s27, 1
        %s398 = smul.addr %s397, 4
        %s399 = smul.addr %s398, 8
        %s400 = scalar_lea.vmem %s0, %s399
        %p401 = pneg %p48
        %p402 = pneg %p45
        %p403 = pneg %p69
        %p404 = pneg %p66
        %p405 = pneg %p90
        %p406 = pneg %p87
        %p407 = pneg %p111
        %p408 = pneg %p108
        %p409 = pneg %p132
        %p410 = pneg %p129
        %p411 = pneg %p153
        %p412 = pneg %p150
        %p413 = pneg %p174
        %p414 = pneg %p171
        %p415 = pneg %p195
        %p416 = pneg %p192
        %p417 = pneg %p216
        %p418 = pneg %p213
        %p419 = pneg %p237
        %p420 = pneg %p234
        %p421 = pneg %p258
        %p422 = pneg %p255
        %p423 = pneg %p279
        %p424 = pneg %p276
        %p425 = pneg %p300
        %p426 = pneg %p297
        %p427 = pneg %p326
        %p428 = pneg %p323
        %s429 = sand.u32 %s313, 1
        %s430 = scalar_lea.sflag [#allocation3], %s429
        %s431 = sand.u32 %s313, 1
        %s432 = scalar_lea.vmem [#allocation2], %s431
        %p433 = scmp.lt.s32.totalorder %s27, 1
        %s434 = scalar_select %p433, %s27, 1
        %s435 = smul.addr %s434, 4
        %s436 = smul.addr %s435, 8
        %s437 = scalar_lea.vmem %s0, %s436
        %v438 = vld [vmem:[%s2] sm:$0x3]
        %v440 = vlaneseq
        %v441 = vshrl.u32 %v440, 7
        %v442 = vsub.s32 0, %v441
        %v443 = vrot.slane %v438, %v442
        %v444 = vlaneseq
        %v445 = vshrl.u32 %v444, 7
        %v446 = vsub.s32 1, %v445
        %v447 = vrot.slane %v438, %v446
        %v450 = vadd.f32 %v443, 0.0
        %v451 = vadd.f32 %v447, 0.0
        %v452 = vld [vmem:[%s437] sm:$0xff]
        %v453 = vld [vmem:[%s437 + $0x8] sm:$0xff]
        %v454 = vld [vmem:[%s437 + $0x10] sm:$0xff]
        %v455 = vld [vmem:[%s1] sm:$0xff]
        %v456 = vld [vmem:[%s1 + $0x8] sm:$0xff]
        %v457 = vld [vmem:[%s1 + $0x10] sm:$0xff]
        %v458 = vld [vmem:[%s1 + $0x18] sm:$0xff]
        %v459 = vld [vmem:[%s1 + $0x20] sm:$0xff]
        %v460 = vld [vmem:[%s1 + $0x28] sm:$0xff]
        %v461 = vld [vmem:[%s1 + $0x30] sm:$0xf]
        %v462 = vld [vmem:[%s1 + $0x38] sm:$0xf]
        %vm463 = vcmask 228352
        %v465 = vsel %vm463, %v452, 0
        %v468 = vsel %vm463, %v453, 0
        %v471 = vsel %vm463, %v454, 0
        %vm473 = vcmask 1043456
        %v475 = vsel %vm473, %v461, 0
        %v478 = vsel %vm473, %v462, 0
        %480 = vmatprep.subr.mxu0 0.0
        %481 = vmatpush1.msra.mxu0 0.0
        %482 = vmatprep.subr.mxu0 0.0
        %483 = vmatpush1.msra.mxu0 0.0
        %484 = vmatprep.subr.mxu0 0.0
        %485 = vmatpush1.msra.mxu0 0.0
        %486 = vmatprep.subr.mxu0 0.0
        %487 = vmatpush1.msra.mxu0 0.0
        %488 = vmatprep.subr.mxu0 0.0
        %489 = vmatpush1.msra.mxu0 0.0
        %490 = vmatprep.subr.mxu0 0.0
        %491 = vmatpush1.msra.mxu0 0.0
        %492 = vmatprep.subr.mxu0 0.0
        %493 = vmatpush1.msra.mxu0 0.0
        %494 = vmatprep.subr.mxu0 0.0
        %495 = vmatpush1.msra.mxu0 0.0
        %496 = vmatprep.subr.mxu0 0.0
        %497 = vmatpush1.msra.mxu0 0.0
        %498 = vmatprep.subr.mxu0 0.0
        %499 = vmatpush1.msra.mxu0 0.0
        %500 = vmatprep.subr.mxu0 0.0
        %501 = vmatpush1.msra.mxu0 0.0
        %502 = vmatprep.subr.mxu0 0.0
        %503 = vmatpush1.msra.mxu0 0.0
        %504 = vmatprep.subr.mxu0 %v478
        %505 = vmatpush1.msra.mxu0 %v475
        %506 = vmatprep.subr.mxu0 %v460
        %507 = vmatpush1.msra.mxu0 %v459
        %508 = vmatprep.subr.mxu0 %v458
        %509 = vmatpush1.msra.mxu0 %v457
        %510 = vmatprep.subr.mxu0 %v456
        %511 = vmatpush1.msra.mxu0 %v455
        %512 = vmatprep.subr.mxu0 0.0
        %513 = vmatpush2.msra.mxu0 0.0
        %514 = vmatprep.subr.mxu0 0.0
        %515 = vmatpush2.msra.mxu0 0.0
        %516 = vmatprep.subr.mxu0 0.0
        %517 = vmatpush2.msra.mxu0 0.0
        %518 = vmatprep.subr.mxu0 0.0
        %519 = vmatpush2.msra.mxu0 0.0
        %520 = vmatprep.subr.mxu0 0.0
        %521 = vmatpush2.msra.mxu0 0.0
        %522 = vmatprep.subr.mxu0 0.0
        %523 = vmatpush2.msra.mxu0 0.0
        %524 = vmatprep.subr.mxu0 0.0
        %525 = vmatpush2.msra.mxu0 0.0
        %526 = vmatprep.subr.mxu0 0.0
        %527 = vmatpush2.msra.mxu0 0.0
        %528 = vmatprep.subr.mxu0 0.0
        %529 = vmatpush2.msra.mxu0 0.0
        %530 = vmatprep.subr.mxu0 0.0
        %531 = vmatpush2.msra.mxu0 0.0
        %532 = vmatprep.subr.mxu0 0.0
        %533 = vmatpush2.msra.mxu0 0.0
        %534 = vmatprep.subr.mxu0 0.0
        %535 = vmatpush2.msra.mxu0 0.0
        %536 = vmatprep.subr.mxu0 0.0
        %537 = vmatpush2.msra.mxu0 0.0
        %538 = vmatprep.subr.mxu0 0.0
        %539 = vmatpush2.msra.mxu0 0.0
        %540 = vmatprep.subr.mxu0 0.0
        %541 = vmatpush2.msra.mxu0 0.0
        %542 = vmatprep.subr.mxu0 0.0
        %543 = vmatpush2.msra.mxu0 0.0
        %544 = vmatprep.mubr.f32.mxu0 0.0
        %545 = vmatmul.mubr.f32.gmra.mxu0 %v465
        %v546 = vpop.f32.mrf.mxu0
        %v547 = vadd.f32 0.0, %v546
        %v548 = vpop.f32.mrf.mxu0
        %v549 = vadd.f32 0.0, %v548
        %550 = vmatprep.mubr.f32.mxu0 0.0
        %551 = vmatmul.mubr.f32.gmra.mxu0 %v468
        %v552 = vpop.f32.mrf.mxu0
        %v553 = vadd.f32 0.0, %v552
        %v554 = vpop.f32.mrf.mxu0
        %v555 = vadd.f32 0.0, %v554
        %556 = vmatprep.mubr.f32.mxu0 0.0
        %557 = vmatmul.mubr.f32.gmra.mxu0 %v471
        %v558 = vpop.f32.mrf.mxu0
        %v559 = vadd.f32 0.0, %v558
        %v560 = vpop.f32.mrf.mxu0
        %v561 = vadd.f32 0.0, %v560
        %562 = vdwg.mxu0
        %v563 = vadd.f32 %v450, %v547
        %v564 = vadd.f32 %v451, %v549
        %v565 = vadd.f32 %v450, %v553
        %v566 = vadd.f32 %v451, %v555
        %v567 = vadd.f32 %v450, %v559
        %v568 = vadd.f32 %v451, %v561
        %v569 = vld [vmem:[%s437 + $0x1] sm:$0xff]
        %v570 = vld [vmem:[%s437 + $0x9] sm:$0xff]
        %v571 = vld [vmem:[%s437 + $0x11] sm:$0xff]
        %s572 = scalar_lea.vmem %s1, 64
        %v573 = vld [vmem:[%s572] sm:$0xff]
        %v574 = vld [vmem:[%s572 + $0x8] sm:$0xff]
        %v575 = vld [vmem:[%s572 + $0x10] sm:$0xff]
        %v576 = vld [vmem:[%s572 + $0x18] sm:$0xff]
        %v577 = vld [vmem:[%s572 + $0x20] sm:$0xff]
        %v578 = vld [vmem:[%s572 + $0x28] sm:$0xff]
        %v579 = vld [vmem:[%s572 + $0x30] sm:$0xf]
        %v580 = vld [vmem:[%s572 + $0x38] sm:$0xf]
        %v582 = vsel %vm463, %v569, 0
        %v585 = vsel %vm463, %v570, 0
        %v588 = vsel %vm463, %v571, 0
        %v591 = vsel %vm473, %v579, 0
        %v594 = vsel %vm473, %v580, 0
        %596 = vmatprep.subr.mxu0 0.0
        %597 = vmatpush1.msra.mxu0 0.0
        %598 = vmatprep.subr.mxu0 0.0
        %599 = vmatpush1.msra.mxu0 0.0
        %600 = vmatprep.subr.mxu0 0.0
        %601 = vmatpush1.msra.mxu0 0.0
        %602 = vmatprep.subr.mxu0 0.0
        %603 = vmatpush1.msra.mxu0 0.0
        %604 = vmatprep.subr.mxu0 0.0
        %605 = vmatpush1.msra.mxu0 0.0
        %606 = vmatprep.subr.mxu0 0.0
        %607 = vmatpush1.msra.mxu0 0.0
        %608 = vmatprep.subr.mxu0 0.0
        %609 = vmatpush1.msra.mxu0 0.0
        %610 = vmatprep.subr.mxu0 0.0
        %611 = vmatpush1.msra.mxu0 0.0
        %612 = vmatprep.subr.mxu0 0.0
        %613 = vmatpush1.msra.mxu0 0.0
        %614 = vmatprep.subr.mxu0 0.0
        %615 = vmatpush1.msra.mxu0 0.0
        %616 = vmatprep.subr.mxu0 0.0
        %617 = vmatpush1.msra.mxu0 0.0
        %618 = vmatprep.subr.mxu0 0.0
        %619 = vmatpush1.msra.mxu0 0.0
        %620 = vmatprep.subr.mxu0 %v594
        %621 = vmatpush1.msra.mxu0 %v591
        %622 = vmatprep.subr.mxu0 %v578
        %623 = vmatpush1.msra.mxu0 %v577
        %624 = vmatprep.subr.mxu0 %v576
        %625 = vmatpush1.msra.mxu0 %v575
        %626 = vmatprep.subr.mxu0 %v574
        %627 = vmatpush1.msra.mxu0 %v573
        %628 = vmatprep.subr.mxu0 0.0
        %629 = vmatpush2.msra.mxu0 0.0
        %630 = vmatprep.subr.mxu0 0.0
        %631 = vmatpush2.msra.mxu0 0.0
        %632 = vmatprep.subr.mxu0 0.0
        %633 = vmatpush2.msra.mxu0 0.0
        %634 = vmatprep.subr.mxu0 0.0
        %635 = vmatpush2.msra.mxu0 0.0
        %636 = vmatprep.subr.mxu0 0.0
        %637 = vmatpush2.msra.mxu0 0.0
        %638 = vmatprep.subr.mxu0 0.0
        %639 = vmatpush2.msra.mxu0 0.0
        %640 = vmatprep.subr.mxu0 0.0
        %641 = vmatpush2.msra.mxu0 0.0
        %642 = vmatprep.subr.mxu0 0.0
        %643 = vmatpush2.msra.mxu0 0.0
        %644 = vmatprep.subr.mxu0 0.0
        %645 = vmatpush2.msra.mxu0 0.0
        %646 = vmatprep.subr.mxu0 0.0
        %647 = vmatpush2.msra.mxu0 0.0
        %648 = vmatprep.subr.mxu0 0.0
        %649 = vmatpush2.msra.mxu0 0.0
        %650 = vmatprep.subr.mxu0 0.0
        %651 = vmatpush2.msra.mxu0 0.0
        %652 = vmatprep.subr.mxu0 0.0
        %653 = vmatpush2.msra.mxu0 0.0
        %654 = vmatprep.subr.mxu0 0.0
        %655 = vmatpush2.msra.mxu0 0.0
        %656 = vmatprep.subr.mxu0 0.0
        %657 = vmatpush2.msra.mxu0 0.0
        %658 = vmatprep.subr.mxu0 0.0
        %659 = vmatpush2.msra.mxu0 0.0
        %660 = vmatprep.mubr.f32.mxu0 0.0
        %661 = vmatmul.mubr.f32.gmra.mxu0 %v582
        %v662 = vpop.f32.mrf.mxu0
        %v663 = vadd.f32 0.0, %v662
        %v664 = vpop.f32.mrf.mxu0
        %v665 = vadd.f32 0.0, %v664
        %666 = vmatprep.mubr.f32.mxu0 0.0
        %667 = vmatmul.mubr.f32.gmra.mxu0 %v585
        %v668 = vpop.f32.mrf.mxu0
        %v669 = vadd.f32 0.0, %v668
        %v670 = vpop.f32.mrf.mxu0
        %v671 = vadd.f32 0.0, %v670
        %672 = vmatprep.mubr.f32.mxu0 0.0
        %673 = vmatmul.mubr.f32.gmra.mxu0 %v588
        %v674 = vpop.f32.mrf.mxu0
        %v675 = vadd.f32 0.0, %v674
        %v676 = vpop.f32.mrf.mxu0
        %v677 = vadd.f32 0.0, %v676
        %678 = vdwg.mxu0
        %v679 = vadd.f32 %v563, %v663
        %v680 = vadd.f32 %v564, %v665
        %v681 = vadd.f32 %v565, %v669
        %v682 = vadd.f32 %v566, %v671
        %v683 = vadd.f32 %v567, %v675
        %v684 = vadd.f32 %v568, %v677
        %v685 = vld [vmem:[%s437 + $0x2] sm:$0xff]
        %v686 = vld [vmem:[%s437 + $0xa] sm:$0xff]
        %v687 = vld [vmem:[%s437 + $0x12] sm:$0xff]
        %s688 = scalar_lea.vmem %s1, 128
        %v689 = vld [vmem:[%s688] sm:$0xff]
        %v690 = vld [vmem:[%s688 + $0x8] sm:$0xff]
        %v691 = vld [vmem:[%s688 + $0x10] sm:$0xff]
        %v692 = vld [vmem:[%s688 + $0x18] sm:$0xff]
        %v693 = vld [vmem:[%s688 + $0x20] sm:$0xff]
        %v694 = vld [vmem:[%s688 + $0x28] sm:$0xff]
        %v695 = vld [vmem:[%s688 + $0x30] sm:$0xf]
        %v696 = vld [vmem:[%s688 + $0x38] sm:$0xf]
        %v698 = vsel %vm463, %v685, 0
        %v701 = vsel %vm463, %v686, 0
        %v704 = vsel %vm463, %v687, 0
        %v707 = vsel %vm473, %v695, 0
        %v710 = vsel %vm473, %v696, 0
        %712 = vmatprep.subr.mxu0 0.0
        %713 = vmatpush1.msra.mxu0 0.0
        %714 = vmatprep.subr.mxu0 0.0
        %715 = vmatpush1.msra.mxu0 0.0
        %716 = vmatprep.subr.mxu0 0.0
        %717 = vmatpush1.msra.mxu0 0.0
        %718 = vmatprep.subr.mxu0 0.0
        %719 = vmatpush1.msra.mxu0 0.0
        %720 = vmatprep.subr.mxu0 0.0
        %721 = vmatpush1.msra.mxu0 0.0
        %722 = vmatprep.subr.mxu0 0.0
        %723 = vmatpush1.msra.mxu0 0.0
        %724 = vmatprep.subr.mxu0 0.0
        %725 = vmatpush1.msra.mxu0 0.0
        %726 = vmatprep.subr.mxu0 0.0
        %727 = vmatpush1.msra.mxu0 0.0
        %728 = vmatprep.subr.mxu0 0.0
        %729 = vmatpush1.msra.mxu0 0.0
        %730 = vmatprep.subr.mxu0 0.0
        %731 = vmatpush1.msra.mxu0 0.0
        %732 = vmatprep.subr.mxu0 0.0
        %733 = vmatpush1.msra.mxu0 0.0
        %734 = vmatprep.subr.mxu0 0.0
        %735 = vmatpush1.msra.mxu0 0.0
        %736 = vmatprep.subr.mxu0 %v710
        %737 = vmatpush1.msra.mxu0 %v707
        %738 = vmatprep.subr.mxu0 %v694
        %739 = vmatpush1.msra.mxu0 %v693
        %740 = vmatprep.subr.mxu0 %v692
        %741 = vmatpush1.msra.mxu0 %v691
        %742 = vmatprep.subr.mxu0 %v690
        %743 = vmatpush1.msra.mxu0 %v689
        %744 = vmatprep.subr.mxu0 0.0
        %745 = vmatpush2.msra.mxu0 0.0
        %746 = vmatprep.subr.mxu0 0.0
        %747 = vmatpush2.msra.mxu0 0.0
        %748 = vmatprep.subr.mxu0 0.0
        %749 = vmatpush2.msra.mxu0 0.0
        %750 = vmatprep.subr.mxu0 0.0
        %751 = vmatpush2.msra.mxu0 0.0
        %752 = vmatprep.subr.mxu0 0.0
        %753 = vmatpush2.msra.mxu0 0.0
        %754 = vmatprep.subr.mxu0 0.0
        %755 = vmatpush2.msra.mxu0 0.0
        %756 = vmatprep.subr.mxu0 0.0
        %757 = vmatpush2.msra.mxu0 0.0
        %758 = vmatprep.subr.mxu0 0.0
        %759 = vmatpush2.msra.mxu0 0.0
        %760 = vmatprep.subr.mxu0 0.0
        %761 = vmatpush2.msra.mxu0 0.0
        %762 = vmatprep.subr.mxu0 0.0
        %763 = vmatpush2.msra.mxu0 0.0
        %764 = vmatprep.subr.mxu0 0.0
        %765 = vmatpush2.msra.mxu0 0.0
        %766 = vmatprep.subr.mxu0 0.0
        %767 = vmatpush2.msra.mxu0 0.0
        %768 = vmatprep.subr.mxu0 0.0
        %769 = vmatpush2.msra.mxu0 0.0
        %770 = vmatprep.subr.mxu0 0.0
        %771 = vmatpush2.msra.mxu0 0.0
        %772 = vmatprep.subr.mxu0 0.0
        %773 = vmatpush2.msra.mxu0 0.0
        %774 = vmatprep.subr.mxu0 0.0
        %775 = vmatpush2.msra.mxu0 0.0
        %776 = vmatprep.mubr.f32.mxu0 0.0
        %777 = vmatmul.mubr.f32.gmra.mxu0 %v698
        %v778 = vpop.f32.mrf.mxu0
        %v779 = vadd.f32 0.0, %v778
        %v780 = vpop.f32.mrf.mxu0
        %v781 = vadd.f32 0.0, %v780
        %782 = vmatprep.mubr.f32.mxu0 0.0
        %783 = vmatmul.mubr.f32.gmra.mxu0 %v701
        %v784 = vpop.f32.mrf.mxu0
        %v785 = vadd.f32 0.0, %v784
        %v786 = vpop.f32.mrf.mxu0
        %v787 = vadd.f32 0.0, %v786
        %788 = vmatprep.mubr.f32.mxu0 0.0
        %789 = vmatmul.mubr.f32.gmra.mxu0 %v704
        %v790 = vpop.f32.mrf.mxu0
        %v791 = vadd.f32 0.0, %v790
        %v792 = vpop.f32.mrf.mxu0
        %v793 = vadd.f32 0.0, %v792
        %794 = vdwg.mxu0
        %v795 = vadd.f32 %v679, %v779
        %v796 = vadd.f32 %v680, %v781
        %v797 = vadd.f32 %v681, %v785
        %v798 = vadd.f32 %v682, %v787
        %v799 = vadd.f32 %v683, %v791
        %v800 = vadd.f32 %v684, %v793
        %v801 = vld [vmem:[%s437 + $0x3] sm:$0xff]
        %v802 = vld [vmem:[%s437 + $0xb] sm:$0xff]
        %v803 = vld [vmem:[%s437 + $0x13] sm:$0xff]
        %s804 = scalar_lea.vmem %s1, 192
        %v805 = vld [vmem:[%s804] sm:$0xff]
        %v806 = vld [vmem:[%s804 + $0x8] sm:$0xff]
        %v807 = vld [vmem:[%s804 + $0x10] sm:$0xff]
        %v808 = vld [vmem:[%s804 + $0x18] sm:$0xff]
        %v809 = vld [vmem:[%s804 + $0x20] sm:$0xff]
        %v810 = vld [vmem:[%s804 + $0x28] sm:$0xff]
        %v811 = vld [vmem:[%s804 + $0x30] sm:$0xf]
        %v812 = vld [vmem:[%s804 + $0x38] sm:$0xf]
        %v814 = vsel %vm463, %v801, 0
        %v817 = vsel %vm463, %v802, 0
        %v820 = vsel %vm463, %v803, 0
        %v823 = vsel %vm473, %v811, 0
        %v826 = vsel %vm473, %v812, 0
        %828 = vmatprep.subr.mxu0 0.0
        %829 = vmatpush1.msra.mxu0 0.0
        %830 = vmatprep.subr.mxu0 0.0
        %831 = vmatpush1.msra.mxu0 0.0
        %832 = vmatprep.subr.mxu0 0.0
        %833 = vmatpush1.msra.mxu0 0.0
        %834 = vmatprep.subr.mxu0 0.0
        %835 = vmatpush1.msra.mxu0 0.0
        %836 = vmatprep.subr.mxu0 0.0
        %837 = vmatpush1.msra.mxu0 0.0
        %838 = vmatprep.subr.mxu0 0.0
        %839 = vmatpush1.msra.mxu0 0.0
        %840 = vmatprep.subr.mxu0 0.0
        %841 = vmatpush1.msra.mxu0 0.0
        %842 = vmatprep.subr.mxu0 0.0
        %843 = vmatpush1.msra.mxu0 0.0
        %844 = vmatprep.subr.mxu0 0.0
        %845 = vmatpush1.msra.mxu0 0.0
        %846 = vmatprep.subr.mxu0 0.0
        %847 = vmatpush1.msra.mxu0 0.0
        %848 = vmatprep.subr.mxu0 0.0
        %849 = vmatpush1.msra.mxu0 0.0
        %850 = vmatprep.subr.mxu0 0.0
        %851 = vmatpush1.msra.mxu0 0.0
        %852 = vmatprep.subr.mxu0 %v826
        %853 = vmatpush1.msra.mxu0 %v823
        %854 = vmatprep.subr.mxu0 %v810
        %855 = vmatpush1.msra.mxu0 %v809
        %856 = vmatprep.subr.mxu0 %v808
        %857 = vmatpush1.msra.mxu0 %v807
        %858 = vmatprep.subr.mxu0 %v806
        %859 = vmatpush1.msra.mxu0 %v805
        %860 = vmatprep.subr.mxu0 0.0
        %861 = vmatpush2.msra.mxu0 0.0
        %862 = vmatprep.subr.mxu0 0.0
        %863 = vmatpush2.msra.mxu0 0.0
        %864 = vmatprep.subr.mxu0 0.0
        %865 = vmatpush2.msra.mxu0 0.0
        %866 = vmatprep.subr.mxu0 0.0
        %867 = vmatpush2.msra.mxu0 0.0
        %868 = vmatprep.subr.mxu0 0.0
        %869 = vmatpush2.msra.mxu0 0.0
        %870 = vmatprep.subr.mxu0 0.0
        %871 = vmatpush2.msra.mxu0 0.0
        %872 = vmatprep.subr.mxu0 0.0
        %873 = vmatpush2.msra.mxu0 0.0
        %874 = vmatprep.subr.mxu0 0.0
        %875 = vmatpush2.msra.mxu0 0.0
        %876 = vmatprep.subr.mxu0 0.0
        %877 = vmatpush2.msra.mxu0 0.0
        %878 = vmatprep.subr.mxu0 0.0
        %879 = vmatpush2.msra.mxu0 0.0
        %880 = vmatprep.subr.mxu0 0.0
        %881 = vmatpush2.msra.mxu0 0.0
        %882 = vmatprep.subr.mxu0 0.0
        %883 = vmatpush2.msra.mxu0 0.0
        %884 = vmatprep.subr.mxu0 0.0
        %885 = vmatpush2.msra.mxu0 0.0
        %886 = vmatprep.subr.mxu0 0.0
        %887 = vmatpush2.msra.mxu0 0.0
        %888 = vmatprep.subr.mxu0 0.0
        %889 = vmatpush2.msra.mxu0 0.0
        %890 = vmatprep.subr.mxu0 0.0
        %891 = vmatpush2.msra.mxu0 0.0
        %892 = vmatprep.mubr.f32.mxu0 0.0
        %893 = vmatmul.mubr.f32.gmra.mxu0 %v814
        %v894 = vpop.f32.mrf.mxu0
        %v895 = vadd.f32 0.0, %v894
        %v896 = vpop.f32.mrf.mxu0
        %v897 = vadd.f32 0.0, %v896
        %898 = vmatprep.mubr.f32.mxu0 0.0
        %899 = vmatmul.mubr.f32.gmra.mxu0 %v817
        %v900 = vpop.f32.mrf.mxu0
        %v901 = vadd.f32 0.0, %v900
        %v902 = vpop.f32.mrf.mxu0
        %v903 = vadd.f32 0.0, %v902
        %904 = vmatprep.mubr.f32.mxu0 0.0
        %905 = vmatmul.mubr.f32.gmra.mxu0 %v820
        %v906 = vpop.f32.mrf.mxu0
        %v907 = vadd.f32 0.0, %v906
        %v908 = vpop.f32.mrf.mxu0
        %v909 = vadd.f32 0.0, %v908
        %910 = vdwg.mxu0
        %v911 = vadd.f32 %v795, %v895
        %v912 = vadd.f32 %v796, %v897
        %v913 = vadd.f32 %v797, %v901
        %v914 = vadd.f32 %v798, %v903
        %v915 = vadd.f32 %v799, %v907
        %v916 = vadd.f32 %v800, %v909
        %v917 = vld [vmem:[%s437 + $0x4] sm:$0xff]
        %v918 = vld [vmem:[%s437 + $0xc] sm:$0xff]
        %v919 = vld [vmem:[%s437 + $0x14] sm:$0xff]
        %s920 = scalar_lea.vmem %s1, 256
        %v921 = vld [vmem:[%s920] sm:$0xff]
        %v922 = vld [vmem:[%s920 + $0x8] sm:$0xff]
        %v923 = vld [vmem:[%s920 + $0x10] sm:$0xff]
        %v924 = vld [vmem:[%s920 + $0x18] sm:$0xff]
        %v925 = vld [vmem:[%s920 + $0x20] sm:$0xff]
        %v926 = vld [vmem:[%s920 + $0x28] sm:$0xff]
        %v927 = vld [vmem:[%s920 + $0x30] sm:$0xf]
        %v928 = vld [vmem:[%s920 + $0x38] sm:$0xf]
        %v930 = vsel %vm463, %v917, 0
        %v933 = vsel %vm463, %v918, 0
        %v936 = vsel %vm463, %v919, 0
        %v939 = vsel %vm473, %v927, 0
        %v942 = vsel %vm473, %v928, 0
        %944 = vmatprep.subr.mxu0 0.0
        %945 = vmatpush1.msra.mxu0 0.0
        %946 = vmatprep.subr.mxu0 0.0
        %947 = vmatpush1.msra.mxu0 0.0
        %948 = vmatprep.subr.mxu0 0.0
        %949 = vmatpush1.msra.mxu0 0.0
        %950 = vmatprep.subr.mxu0 0.0
        %951 = vmatpush1.msra.mxu0 0.0
        %952 = vmatprep.subr.mxu0 0.0
        %953 = vmatpush1.msra.mxu0 0.0
        %954 = vmatprep.subr.mxu0 0.0
        %955 = vmatpush1.msra.mxu0 0.0
        %956 = vmatprep.subr.mxu0 0.0
        %957 = vmatpush1.msra.mxu0 0.0
        %958 = vmatprep.subr.mxu0 0.0
        %959 = vmatpush1.msra.mxu0 0.0
        %960 = vmatprep.subr.mxu0 0.0
        %961 = vmatpush1.msra.mxu0 0.0
        %962 = vmatprep.subr.mxu0 0.0
        %963 = vmatpush1.msra.mxu0 0.0
        %964 = vmatprep.subr.mxu0 0.0
        %965 = vmatpush1.msra.mxu0 0.0
        %966 = vmatprep.subr.mxu0 0.0
        %967 = vmatpush1.msra.mxu0 0.0
        %968 = vmatprep.subr.mxu0 %v942
        %969 = vmatpush1.msra.mxu0 %v939
        %970 = vmatprep.subr.mxu0 %v926
        %971 = vmatpush1.msra.mxu0 %v925
        %972 = vmatprep.subr.mxu0 %v924
        %973 = vmatpush1.msra.mxu0 %v923
        %974 = vmatprep.subr.mxu0 %v922
        %975 = vmatpush1.msra.mxu0 %v921
        %976 = vmatprep.subr.mxu0 0.0
        %977 = vmatpush2.msra.mxu0 0.0
        %978 = vmatprep.subr.mxu0 0.0
        %979 = vmatpush2.msra.mxu0 0.0
        %980 = vmatprep.subr.mxu0 0.0
        %981 = vmatpush2.msra.mxu0 0.0
        %982 = vmatprep.subr.mxu0 0.0
        %983 = vmatpush2.msra.mxu0 0.0
        %984 = vmatprep.subr.mxu0 0.0
        %985 = vmatpush2.msra.mxu0 0.0
        %986 = vmatprep.subr.mxu0 0.0
        %987 = vmatpush2.msra.mxu0 0.0
        %988 = vmatprep.subr.mxu0 0.0
        %989 = vmatpush2.msra.mxu0 0.0
        %990 = vmatprep.subr.mxu0 0.0
        %991 = vmatpush2.msra.mxu0 0.0
        %992 = vmatprep.subr.mxu0 0.0
        %993 = vmatpush2.msra.mxu0 0.0
        %994 = vmatprep.subr.mxu0 0.0
        %995 = vmatpush2.msra.mxu0 0.0
        %996 = vmatprep.subr.mxu0 0.0
        %997 = vmatpush2.msra.mxu0 0.0
        %998 = vmatprep.subr.mxu0 0.0
        %999 = vmatpush2.msra.mxu0 0.0
        %1000 = vmatprep.subr.mxu0 0.0
        %1001 = vmatpush2.msra.mxu0 0.0
        %1002 = vmatprep.subr.mxu0 0.0
        %1003 = vmatpush2.msra.mxu0 0.0
        %1004 = vmatprep.subr.mxu0 0.0
        %1005 = vmatpush2.msra.mxu0 0.0
        %1006 = vmatprep.subr.mxu0 0.0
        %1007 = vmatpush2.msra.mxu0 0.0
        %1008 = vmatprep.mubr.f32.mxu0 0.0
        %1009 = vmatmul.mubr.f32.gmra.mxu0 %v930
        %v1010 = vpop.f32.mrf.mxu0
        %v1011 = vadd.f32 0.0, %v1010
        %v1012 = vpop.f32.mrf.mxu0
        %v1013 = vadd.f32 0.0, %v1012
        %1014 = vmatprep.mubr.f32.mxu0 0.0
        %1015 = vmatmul.mubr.f32.gmra.mxu0 %v933
        %v1016 = vpop.f32.mrf.mxu0
        %v1017 = vadd.f32 0.0, %v1016
        %v1018 = vpop.f32.mrf.mxu0
        %v1019 = vadd.f32 0.0, %v1018
        %1020 = vmatprep.mubr.f32.mxu0 0.0
        %1021 = vmatmul.mubr.f32.gmra.mxu0 %v936
        %v1022 = vpop.f32.mrf.mxu0
        %v1023 = vadd.f32 0.0, %v1022
        %v1024 = vpop.f32.mrf.mxu0
        %v1025 = vadd.f32 0.0, %v1024
        %1026 = vdwg.mxu0
        %v1027 = vadd.f32 %v911, %v1011
        %v1028 = vadd.f32 %v912, %v1013
        %v1029 = vadd.f32 %v913, %v1017
        %v1030 = vadd.f32 %v914, %v1019
        %v1031 = vadd.f32 %v915, %v1023
        %v1032 = vadd.f32 %v916, %v1025
        %vm1039 = vcmask 1046528
        %v1040 = vrot.slane %v1027, 1
        %v1041 = vrot.slane %v1029, 1
        %v1042 = vsel %vm1039, %v1040, %v1041
        %v1043 = vrot.slane %v1028, 1
        %v1044 = vrot.slane %v1030, 1
        %v1045 = vsel %vm1039, %v1043, %v1044
        %v1046 = vrot.slane %v1031, 1
        %v1047 = vsel %vm1039, %v1041, %v1046
        %v1048 = vrot.slane %v1032, 1
        %v1049 = vsel %vm1039, %v1044, %v1048
        %v1056 = vmax.f32 %v1027, %v1042
        %v1057 = vmax.f32 %v1028, %v1045
        %v1058 = vmax.f32 %v1029, %v1047
        %v1059 = vmax.f32 %v1030, %v1049
        %v1060 = vmax.f32 %v1031, %v1046
        %v1061 = vmax.f32 %v1032, %v1048
        %v1062 = vld [vmem:[%s3] sm:$0xff]
        %v1063 = vld [vmem:[%s3 + $0x8] sm:$0xf]
        %vm1064 = vcmask 187392
        %v1066 = vsel %vm1064, %v1062, 0
        %v1069 = vsel %vm1064, %v1063, 0
        %v1072 = vsel %vm1039, %v1060, 0
        %v1075 = vsel %vm1039, %v1061, 0
        %1077 = vmatprep.subr.mxu0 0.0
        %1078 = vmatpush1.msra.mxu0 0.0
        %1079 = vmatprep.subr.mxu0 0.0
        %1080 = vmatpush1.msra.mxu0 0.0
        %1081 = vmatprep.subr.mxu0 0.0
        %1082 = vmatpush1.msra.mxu0 0.0
        %1083 = vmatprep.subr.mxu0 0.0
        %1084 = vmatpush1.msra.mxu0 0.0
        %1085 = vmatprep.subr.mxu0 0.0
        %1086 = vmatpush1.msra.mxu0 0.0
        %1087 = vmatprep.subr.mxu0 0.0
        %1088 = vmatpush1.msra.mxu0 0.0
        %1089 = vmatprep.subr.mxu0 0.0
        %1090 = vmatpush1.msra.mxu0 0.0
        %1091 = vmatprep.subr.mxu0 0.0
        %1092 = vmatpush1.msra.mxu0 0.0
        %1093 = vmatprep.subr.mxu0 0.0
        %1094 = vmatpush1.msra.mxu0 0.0
        %1095 = vmatprep.subr.mxu0 0.0
        %1096 = vmatpush1.msra.mxu0 0.0
        %1097 = vmatprep.subr.mxu0 0.0
        %1098 = vmatpush1.msra.mxu0 0.0
        %1099 = vmatprep.subr.mxu0 0.0
        %1100 = vmatpush1.msra.mxu0 0.0
        %1101 = vmatprep.subr.mxu0 0.0
        %1102 = vmatpush1.msra.mxu0 0.0
        %1103 = vmatprep.subr.mxu0 %v1075
        %1104 = vmatpush1.msra.mxu0 %v1072
        %1105 = vmatprep.subr.mxu0 %v1059
        %1106 = vmatpush1.msra.mxu0 %v1058
        %1107 = vmatprep.subr.mxu0 %v1057
        %1108 = vmatpush1.msra.mxu0 %v1056
        %1109 = vmatprep.subr.mxu0 0.0
        %1110 = vmatpush2.msra.mxu0 0.0
        %1111 = vmatprep.subr.mxu0 0.0
        %1112 = vmatpush2.msra.mxu0 0.0
        %1113 = vmatprep.subr.mxu0 0.0
        %1114 = vmatpush2.msra.mxu0 0.0
        %1115 = vmatprep.subr.mxu0 0.0
        %1116 = vmatpush2.msra.mxu0 0.0
        %1117 = vmatprep.subr.mxu0 0.0
        %1118 = vmatpush2.msra.mxu0 0.0
        %1119 = vmatprep.subr.mxu0 0.0
        %1120 = vmatpush2.msra.mxu0 0.0
        %1121 = vmatprep.subr.mxu0 0.0
        %1122 = vmatpush2.msra.mxu0 0.0
        %1123 = vmatprep.subr.mxu0 0.0
        %1124 = vmatpush2.msra.mxu0 0.0
        %1125 = vmatprep.subr.mxu0 0.0
        %1126 = vmatpush2.msra.mxu0 0.0
        %1127 = vmatprep.subr.mxu0 0.0
        %1128 = vmatpush2.msra.mxu0 0.0
        %1129 = vmatprep.subr.mxu0 0.0
        %1130 = vmatpush2.msra.mxu0 0.0
        %1131 = vmatprep.subr.mxu0 0.0
        %1132 = vmatpush2.msra.mxu0 0.0
        %1133 = vmatprep.subr.mxu0 0.0
        %1134 = vmatpush2.msra.mxu0 0.0
        %1135 = vmatprep.subr.mxu0 0.0
        %1136 = vmatpush2.msra.mxu0 0.0
        %1137 = vmatprep.subr.mxu0 0.0
        %1138 = vmatpush2.msra.mxu0 0.0
        %1139 = vmatprep.subr.mxu0 0.0
        %1140 = vmatpush2.msra.mxu0 0.0
        %1141 = vmatprep.mubr.f32.mxu0 0.0
        %1142 = vmatmul.mubr.f32.gmra.mxu0 %v1066
        %v1143 = vpop.f32.mrf.mxu0
        %v1144 = vadd.f32 0.0, %v1143
        %v1145 = vpop.f32.mrf.mxu0
        %v1146 = vadd.f32 0.0, %v1145
        %1147 = vmatprep.mubr.f32.mxu0 0.0
        %1148 = vmatmul.mubr.f32.gmra.mxu0 %v1069
        %v1149 = vpop.f32.mrf.mxu0
        %v1150 = vadd.f32 0.0, %v1149
        %v1151 = vpop.f32.mrf.mxu0
        %v1152 = vadd.f32 0.0, %v1151
        %1153 = vdwg.mxu0
        %1158 = vrot.lane.b32.xlu0 %v1144, 127
        %v1159 = vpop.permute.xlu0 %1158
        %1160 = vrot.lane.b32.xlu0 %v1146, 127
        %v1161 = vpop.permute.xlu0 %1160
        %1162 = vrot.lane.b32.xlu0 %v1150, 127
        %v1163 = vpop.permute.xlu0 %1162
        %1164 = vrot.lane.b32.xlu0 %v1152, 127
        %v1165 = vpop.permute.xlu0 %1164
        %vm1166 = vcmask 1039360
        %v1167 = vsel %vm1166, %v1159, %v1161
        %v1168 = vsel %vm1166, %v1163, %v1165
        %v1173 = vmax.f32 %v1144, %v1167
        %v1174 = vmax.f32 %v1146, %v1161
        %v1175 = vmax.f32 %v1150, %v1168
        %v1176 = vmax.f32 %v1152, %v1165
        %v1177 = vld [vmem:[%s4] sm:$0xff]
        %v1178 = vld [vmem:[%s4 + $0x8] sm:$0xff]
        %v1179 = vld [vmem:[%s4 + $0x10] sm:$0xff]
        %v1180 = vld [vmem:[%s4 + $0x18] sm:$0xff]
        %v1181 = vld [vmem:[%s4 + $0x20] sm:$0xff]
        %v1182 = vld [vmem:[%s4 + $0x28] sm:$0xff]
        %v1183 = vld [vmem:[%s4 + $0x30] sm:$0xff]
        %v1184 = vld [vmem:[%s4 + $0x38] sm:$0xff]
        %v1185 = vld [vmem:[%s4 + $0x40] sm:$0xff]
        %v1186 = vld [vmem:[%s4 + $0x48] sm:$0xff]
        %v1187 = vld [vmem:[%s4 + $0x50] sm:$0xff]
        %v1188 = vld [vmem:[%s4 + $0x58] sm:$0xff]
        %v1189 = vld [vmem:[%s4 + $0x60] sm:$0xff]
        %v1190 = vld [vmem:[%s4 + $0x68] sm:$0xff]
        %v1191 = vld [vmem:[%s4 + $0x70] sm:$0xff]
        %v1192 = vld [vmem:[%s4 + $0x78] sm:$0xff]
        %v1193 = vld [vmem:[%s4 + $0x80] sm:$0xff]
        %v1194 = vld [vmem:[%s4 + $0x88] sm:$0xff]
        %v1195 = vld [vmem:[%s4 + $0x90] sm:$0xff]
        %v1196 = vld [vmem:[%s4 + $0x98] sm:$0xff]
        %v1197 = vld [vmem:[%s4 + $0xa0] sm:$0xff]
        %v1198 = vld [vmem:[%s4 + $0xa8] sm:$0xff]
        %v1199 = vld [vmem:[%s4 + $0xb0] sm:$0xff]
        %v1200 = vld [vmem:[%s4 + $0xb8] sm:$0xff]
        %v1201 = vld [vmem:[%s4 + $0xc0] sm:$0xff]
        %v1202 = vld [vmem:[%s4 + $0xc8] sm:$0xff]
        %v1203 = vld [vmem:[%s4 + $0xd0] sm:$0xff]
        %v1204 = vld [vmem:[%s4 + $0xd8] sm:$0xff]
        %v1205 = vld [vmem:[%s4 + $0xe0] sm:$0xff]
        %v1206 = vld [vmem:[%s4 + $0xe8] sm:$0x7f]
        %vm1207 = vcmask 908288
        %v1209 = vsel %vm1207, %v1174, 0
        %v1212 = vsel %vm1207, %v1176, 0
        %v1215 = vsel %vm1039, %v1206, 0
        %1217 = vmatprep.subr.mxu0 0.0
        %1218 = vmatpush1.msra.mxu0 %v1192
        %1219 = vmatprep.subr.mxu0 0.0
        %1220 = vmatpush1.msra.mxu0 %v1191
        %1221 = vmatprep.subr.mxu0 0.0
        %1222 = vmatpush1.msra.mxu0 %v1190
        %1223 = vmatprep.subr.mxu0 0.0
        %1224 = vmatpush1.msra.mxu0 %v1189
        %1225 = vmatprep.subr.mxu0 0.0
        %1226 = vmatpush1.msra.mxu0 %v1188
        %1227 = vmatprep.subr.mxu0 0.0
        %1228 = vmatpush1.msra.mxu0 %v1187
        %1229 = vmatprep.subr.mxu0 0.0
        %1230 = vmatpush1.msra.mxu0 %v1186
        %1231 = vmatprep.subr.mxu0 0.0
        %1232 = vmatpush1.msra.mxu0 %v1185
        %1233 = vmatprep.subr.mxu0 0.0
        %1234 = vmatpush1.msra.mxu0 %v1184
        %1235 = vmatprep.subr.mxu0 0.0
        %1236 = vmatpush1.msra.mxu0 %v1183
        %1237 = vmatprep.subr.mxu0 0.0
        %1238 = vmatpush1.msra.mxu0 %v1182
        %1239 = vmatprep.subr.mxu0 0.0
        %1240 = vmatpush1.msra.mxu0 %v1181
        %1241 = vmatprep.subr.mxu0 0.0
        %1242 = vmatpush1.msra.mxu0 %v1180
        %1243 = vmatprep.subr.mxu0 0.0
        %1244 = vmatpush1.msra.mxu0 %v1179
        %1245 = vmatprep.subr.mxu0 0.0
        %1246 = vmatpush1.msra.mxu0 %v1178
        %1247 = vmatprep.subr.mxu0 0.0
        %1248 = vmatpush1.msra.mxu0 %v1177
        %1249 = vmatprep.subr.mxu0 0.0
        %1250 = vmatpush2.msra.mxu0 0.0
        %1251 = vmatprep.subr.mxu0 0.0
        %1252 = vmatpush2.msra.mxu0 0.0
        %1253 = vmatprep.subr.mxu0 0.0
        %1254 = vmatpush2.msra.mxu0 %v1215
        %1255 = vmatprep.subr.mxu0 0.0
        %1256 = vmatpush2.msra.mxu0 %v1205
        %1257 = vmatprep.subr.mxu0 0.0
        %1258 = vmatpush2.msra.mxu0 %v1204
        %1259 = vmatprep.subr.mxu0 0.0
        %1260 = vmatpush2.msra.mxu0 %v1203
        %1261 = vmatprep.subr.mxu0 0.0
        %1262 = vmatpush2.msra.mxu0 %v1202
        %1263 = vmatprep.subr.mxu0 0.0
        %1264 = vmatpush2.msra.mxu0 %v1201
        %1265 = vmatprep.subr.mxu0 0.0
        %1266 = vmatpush2.msra.mxu0 %v1200
        %1267 = vmatprep.subr.mxu0 0.0
        %1268 = vmatpush2.msra.mxu0 %v1199
        %1269 = vmatprep.subr.mxu0 0.0
        %1270 = vmatpush2.msra.mxu0 %v1198
        %1271 = vmatprep.subr.mxu0 0.0
        %1272 = vmatpush2.msra.mxu0 %v1197
        %1273 = vmatprep.subr.mxu0 0.0
        %1274 = vmatpush2.msra.mxu0 %v1196
        %1275 = vmatprep.subr.mxu0 0.0
        %1276 = vmatpush2.msra.mxu0 %v1195
        %1277 = vmatprep.subr.mxu0 0.0
        %1278 = vmatpush2.msra.mxu0 %v1194
        %1279 = vmatprep.subr.mxu0 0.0
        %1280 = vmatpush2.msra.mxu0 %v1193
        %1281 = vmatprep.mubr.f32.mxu0 %v1209
        %1282 = vmatmul.mubr.f32.gmra.mxu0 %v1173
        %v1283 = vpop.f32.mrf.mxu0
        %v1284 = vadd.f32 0.0, %v1283
        %v1285 = vpop.f32.mrf.mxu0
        %1286 = vmatprep.mubr.f32.mxu0 %v1212
        %1287 = vmatmul.mubr.f32.gmra.mxu0 %v1175
        %v1288 = vpop.f32.mrf.mxu0
        %v1289 = vadd.f32 0.0, %v1288
        %v1290 = vpop.f32.mrf.mxu0
        %1291 = vdwg.mxu0
        %v1292 = vmax.f32 %v1284, 0.0
        %v1293 = vmax.f32 %v1289, 0.0
        %v1294 = vld [vmem:[%s6] sm:$0x3]
        %v1296 = vlaneseq
        %v1297 = vshrl.u32 %v1296, 7
        %v1298 = vsub.s32 0, %v1297
        %v1299 = vrot.slane %v1294, %v1298
        %v1300 = vlaneseq
        %v1301 = vshrl.u32 %v1300, 7
        %v1302 = vsub.s32 1, %v1301
        %v1303 = vrot.slane %v1294, %v1302
        %v1306 = vadd.f32 %v1299, 0.0
        %v1307 = vadd.f32 %v1303, 0.0
        %v1308 = vld [vmem:[%s5] sm:$0xff]
        %v1309 = vld [vmem:[%s5 + $0x8] sm:$0xff]
        %v1310 = vld [vmem:[%s5 + $0x10] sm:$0xff]
        %v1311 = vld [vmem:[%s5 + $0x18] sm:$0xff]
        %v1312 = vld [vmem:[%s5 + $0x20] sm:$0xff]
        %v1313 = vld [vmem:[%s5 + $0x28] sm:$0xff]
        %v1314 = vld [vmem:[%s5 + $0x30] sm:$0xff]
        %v1315 = vld [vmem:[%s5 + $0x38] sm:$0xff]
        %v1316 = vld [vmem:[%s5 + $0x40] sm:$0xff]
        %v1317 = vld [vmem:[%s5 + $0x48] sm:$0xff]
        %v1318 = vld [vmem:[%s5 + $0x50] sm:$0xff]
        %v1319 = vld [vmem:[%s5 + $0x58] sm:$0xff]
        %v1320 = vld [vmem:[%s5 + $0x60] sm:$0xff]
        %v1321 = vld [vmem:[%s5 + $0x68] sm:$0xff]
        %v1322 = vld [vmem:[%s5 + $0x70] sm:$0xff]
        %v1323 = vld [vmem:[%s5 + $0x78] sm:$0xff]
        %v1324 = vld [vmem:[%s5 + $0x80] sm:$0xff]
        %v1325 = vld [vmem:[%s5 + $0x88] sm:$0xff]
        %v1326 = vld [vmem:[%s5 + $0x90] sm:$0xff]
        %v1327 = vld [vmem:[%s5 + $0x98] sm:$0xff]
        %v1328 = vld [vmem:[%s5 + $0xa0] sm:$0xff]
        %v1329 = vld [vmem:[%s5 + $0xa8] sm:$0xff]
        %v1330 = vld [vmem:[%s5 + $0xb0] sm:$0xff]
        %v1331 = vld [vmem:[%s5 + $0xb8] sm:$0xff]
        %v1332 = vld [vmem:[%s5 + $0xc0] sm:$0xff]
        %v1333 = vld [vmem:[%s5 + $0xc8] sm:$0xff]
        %v1334 = vld [vmem:[%s5 + $0xd0] sm:$0xff]
        %v1335 = vld [vmem:[%s5 + $0xd8] sm:$0xff]
        %v1336 = vld [vmem:[%s5 + $0xe0] sm:$0xff]
        %v1337 = vld [vmem:[%s5 + $0xe8] sm:$0xff]
        %vm1338 = vcmask 982016
        %v1340 = vsel %vm1338, %v1292, 0
        %1342 = vmatprep.subr.mxu0 0.0
        %1343 = vmatpush1.msra.mxu0 0.0
        %1344 = vmatprep.subr.mxu0 %v1337
        %1345 = vmatpush1.msra.mxu0 %v1336
        %1346 = vmatprep.subr.mxu0 %v1335
        %1347 = vmatpush1.msra.mxu0 %v1334
        %1348 = vmatprep.subr.mxu0 %v1333
        %1349 = vmatpush1.msra.mxu0 %v1332
        %1350 = vmatprep.subr.mxu0 %v1331
        %1351 = vmatpush1.msra.mxu0 %v1330
        %1352 = vmatprep.subr.mxu0 %v1329
        %1353 = vmatpush1.msra.mxu0 %v1328
        %1354 = vmatprep.subr.mxu0 %v1327
        %1355 = vmatpush1.msra.mxu0 %v1326
        %1356 = vmatprep.subr.mxu0 %v1325
        %1357 = vmatpush1.msra.mxu0 %v1324
        %1358 = vmatprep.subr.mxu0 %v1323
        %1359 = vmatpush1.msra.mxu0 %v1322
        %1360 = vmatprep.subr.mxu0 %v1321
        %1361 = vmatpush1.msra.mxu0 %v1320
        %1362 = vmatprep.subr.mxu0 %v1319
        %1363 = vmatpush1.msra.mxu0 %v1318
        %1364 = vmatprep.subr.mxu0 %v1317
        %1365 = vmatpush1.msra.mxu0 %v1316
        %1366 = vmatprep.subr.mxu0 %v1315
        %1367 = vmatpush1.msra.mxu0 %v1314
        %1368 = vmatprep.subr.mxu0 %v1313
        %1369 = vmatpush1.msra.mxu0 %v1312
        %1370 = vmatprep.subr.mxu0 %v1311
        %1371 = vmatpush1.msra.mxu0 %v1310
        %1372 = vmatprep.subr.mxu0 %v1309
        %1373 = vmatpush1.msra.mxu0 %v1308
        %1374 = vmatprep.subr.mxu0 0.0
        %1375 = vmatpush2.msra.mxu0 0.0
        %1376 = vmatprep.subr.mxu0 0.0
        %1377 = vmatpush2.msra.mxu0 0.0
        %1378 = vmatprep.subr.mxu0 0.0
        %1379 = vmatpush2.msra.mxu0 0.0
        %1380 = vmatprep.subr.mxu0 0.0
        %1381 = vmatpush2.msra.mxu0 0.0
        %1382 = vmatprep.subr.mxu0 0.0
        %1383 = vmatpush2.msra.mxu0 0.0
        %1384 = vmatprep.subr.mxu0 0.0
        %1385 = vmatpush2.msra.mxu0 0.0
        %1386 = vmatprep.subr.mxu0 0.0
        %1387 = vmatpush2.msra.mxu0 0.0
        %1388 = vmatprep.subr.mxu0 0.0
        %1389 = vmatpush2.msra.mxu0 0.0
        %1390 = vmatprep.subr.mxu0 0.0
        %1391 = vmatpush2.msra.mxu0 0.0
        %1392 = vmatprep.subr.mxu0 0.0
        %1393 = vmatpush2.msra.mxu0 0.0
        %1394 = vmatprep.subr.mxu0 0.0
        %1395 = vmatpush2.msra.mxu0 0.0
        %1396 = vmatprep.subr.mxu0 0.0
        %1397 = vmatpush2.msra.mxu0 0.0
        %1398 = vmatprep.subr.mxu0 0.0
        %1399 = vmatpush2.msra.mxu0 0.0
        %1400 = vmatprep.subr.mxu0 0.0
        %1401 = vmatpush2.msra.mxu0 0.0
        %1402 = vmatprep.subr.mxu0 0.0
        %1403 = vmatpush2.msra.mxu0 0.0
        %1404 = vmatprep.subr.mxu0 0.0
        %1405 = vmatpush2.msra.mxu0 0.0
        %1406 = vmatprep.mubr.f32.mxu0 0.0
        %1407 = vmatmul.mubr.f32.gmra.mxu0 %v1340
        %v1408 = vpop.f32.mrf.mxu0
        %v1409 = vadd.f32 0.0, %v1408
        %v1410 = vpop.f32.mrf.mxu0
        %v1411 = vadd.f32 0.0, %v1410
        %1412 = vdwg.mxu0
        %v1413 = vadd.f32 %v1306, %v1409
        %v1414 = vadd.f32 %v1307, %v1411
        %s1415 = scalar_lea.vmem %s5, 240
        %v1416 = vld [vmem:[%s1415] sm:$0xff]
        %v1417 = vld [vmem:[%s1415 + $0x8] sm:$0xff]
        %v1418 = vld [vmem:[%s1415 + $0x10] sm:$0xff]
        %v1419 = vld [vmem:[%s1415 + $0x18] sm:$0xff]
        %v1420 = vld [vmem:[%s1415 + $0x20] sm:$0xff]
        %v1421 = vld [vmem:[%s1415 + $0x28] sm:$0xff]
        %v1422 = vld [vmem:[%s1415 + $0x30] sm:$0xff]
        %v1423 = vld [vmem:[%s1415 + $0x38] sm:$0xff]
        %v1424 = vld [vmem:[%s1415 + $0x40] sm:$0xff]
        %v1425 = vld [vmem:[%s1415 + $0x48] sm:$0xff]
        %v1426 = vld [vmem:[%s1415 + $0x50] sm:$0xff]
        %v1427 = vld [vmem:[%s1415 + $0x58] sm:$0xff]
        %v1428 = vld [vmem:[%s1415 + $0x60] sm:$0xff]
        %v1429 = vld [vmem:[%s1415 + $0x68] sm:$0xff]
        %v1430 = vld [vmem:[%s1415 + $0x70] sm:$0xff]
        %v1431 = vld [vmem:[%s1415 + $0x78] sm:$0xff]
        %v1432 = vld [vmem:[%s1415 + $0x80] sm:$0xff]
        %v1433 = vld [vmem:[%s1415 + $0x88] sm:$0xff]
        %v1434 = vld [vmem:[%s1415 + $0x90] sm:$0xff]
        %v1435 = vld [vmem:[%s1415 + $0x98] sm:$0xff]
        %v1436 = vld [vmem:[%s1415 + $0xa0] sm:$0xff]
        %v1437 = vld [vmem:[%s1415 + $0xa8] sm:$0xff]
        %v1438 = vld [vmem:[%s1415 + $0xb0] sm:$0xff]
        %v1439 = vld [vmem:[%s1415 + $0xb8] sm:$0xff]
        %v1440 = vld [vmem:[%s1415 + $0xc0] sm:$0xff]
        %v1441 = vld [vmem:[%s1415 + $0xc8] sm:$0xff]
        %v1442 = vld [vmem:[%s1415 + $0xd0] sm:$0xff]
        %v1443 = vld [vmem:[%s1415 + $0xd8] sm:$0xff]
        %v1444 = vld [vmem:[%s1415 + $0xe0] sm:$0xff]
        %v1445 = vld [vmem:[%s1415 + $0xe8] sm:$0xff]
        %v1447 = vrot.slane %v1292, 1
        %v1448 = vrot.slane %v1293, 1
        %v1449 = vsel %vm1039, %v1447, %v1448
        %v1450 = vsel %vm1338, %v1449, 0
        %1452 = vmatprep.subr.mxu0 0.0
        %1453 = vmatpush1.msra.mxu0 0.0
        %1454 = vmatprep.subr.mxu0 %v1445
        %1455 = vmatpush1.msra.mxu0 %v1444
        %1456 = vmatprep.subr.mxu0 %v1443
        %1457 = vmatpush1.msra.mxu0 %v1442
        %1458 = vmatprep.subr.mxu0 %v1441
        %1459 = vmatpush1.msra.mxu0 %v1440
        %1460 = vmatprep.subr.mxu0 %v1439
        %1461 = vmatpush1.msra.mxu0 %v1438
        %1462 = vmatprep.subr.mxu0 %v1437
        %1463 = vmatpush1.msra.mxu0 %v1436
        %1464 = vmatprep.subr.mxu0 %v1435
        %1465 = vmatpush1.msra.mxu0 %v1434
        %1466 = vmatprep.subr.mxu0 %v1433
        %1467 = vmatpush1.msra.mxu0 %v1432
        %1468 = vmatprep.subr.mxu0 %v1431
        %1469 = vmatpush1.msra.mxu0 %v1430
        %1470 = vmatprep.subr.mxu0 %v1429
        %1471 = vmatpush1.msra.mxu0 %v1428
        %1472 = vmatprep.subr.mxu0 %v1427
        %1473 = vmatpush1.msra.mxu0 %v1426
        %1474 = vmatprep.subr.mxu0 %v1425
        %1475 = vmatpush1.msra.mxu0 %v1424
        %1476 = vmatprep.subr.mxu0 %v1423
        %1477 = vmatpush1.msra.mxu0 %v1422
        %1478 = vmatprep.subr.mxu0 %v1421
        %1479 = vmatpush1.msra.mxu0 %v1420
        %1480 = vmatprep.subr.mxu0 %v1419
        %1481 = vmatpush1.msra.mxu0 %v1418
        %1482 = vmatprep.subr.mxu0 %v1417
        %1483 = vmatpush1.msra.mxu0 %v1416
        %1484 = vmatprep.subr.mxu0 0.0
        %1485 = vmatpush2.msra.mxu0 0.0
        %1486 = vmatprep.subr.mxu0 0.0
        %1487 = vmatpush2.msra.mxu0 0.0
        %1488 = vmatprep.subr.mxu0 0.0
        %1489 = vmatpush2.msra.mxu0 0.0
        %1490 = vmatprep.subr.mxu0 0.0
        %1491 = vmatpush2.msra.mxu0 0.0
        %1492 = vmatprep.subr.mxu0 0.0
        %1493 = vmatpush2.msra.mxu0 0.0
        %1494 = vmatprep.subr.mxu0 0.0
        %1495 = vmatpush2.msra.mxu0 0.0
        %1496 = vmatprep.subr.mxu0 0.0
        %1497 = vmatpush2.msra.mxu0 0.0
        %1498 = vmatprep.subr.mxu0 0.0
        %1499 = vmatpush2.msra.mxu0 0.0
        %1500 = vmatprep.subr.mxu0 0.0
        %1501 = vmatpush2.msra.mxu0 0.0
        %1502 = vmatprep.subr.mxu0 0.0
        %1503 = vmatpush2.msra.mxu0 0.0
        %1504 = vmatprep.subr.mxu0 0.0
        %1505 = vmatpush2.msra.mxu0 0.0
        %1506 = vmatprep.subr.mxu0 0.0
        %1507 = vmatpush2.msra.mxu0 0.0
        %1508 = vmatprep.subr.mxu0 0.0
        %1509 = vmatpush2.msra.mxu0 0.0
        %1510 = vmatprep.subr.mxu0 0.0
        %1511 = vmatpush2.msra.mxu0 0.0
        %1512 = vmatprep.subr.mxu0 0.0
        %1513 = vmatpush2.msra.mxu0 0.0
        %1514 = vmatprep.subr.mxu0 0.0
        %1515 = vmatpush2.msra.mxu0 0.0
        %1516 = vmatprep.mubr.f32.mxu0 0.0
        %1517 = vmatmul.mubr.f32.gmra.mxu0 %v1450
        %v1518 = vpop.f32.mrf.mxu0
        %v1519 = vadd.f32 0.0, %v1518
        %v1520 = vpop.f32.mrf.mxu0
        %v1521 = vadd.f32 0.0, %v1520
        %1522 = vdwg.mxu0
        %v1523 = vadd.f32 %v1413, %v1519
        %v1524 = vadd.f32 %v1414, %v1521
        %s1525 = scalar_lea.vmem %s5, 480
        %v1526 = vld [vmem:[%s1525] sm:$0xff]
        %v1527 = vld [vmem:[%s1525 + $0x8] sm:$0xff]
        %v1528 = vld [vmem:[%s1525 + $0x10] sm:$0xff]
        %v1529 = vld [vmem:[%s1525 + $0x18] sm:$0xff]
        %v1530 = vld [vmem:[%s1525 + $0x20] sm:$0xff]
        %v1531 = vld [vmem:[%s1525 + $0x28] sm:$0xff]
        %v1532 = vld [vmem:[%s1525 + $0x30] sm:$0xff]
        %v1533 = vld [vmem:[%s1525 + $0x38] sm:$0xff]
        %v1534 = vld [vmem:[%s1525 + $0x40] sm:$0xff]
        %v1535 = vld [vmem:[%s1525 + $0x48] sm:$0xff]
        %v1536 = vld [vmem:[%s1525 + $0x50] sm:$0xff]
        %v1537 = vld [vmem:[%s1525 + $0x58] sm:$0xff]
        %v1538 = vld [vmem:[%s1525 + $0x60] sm:$0xff]
        %v1539 = vld [vmem:[%s1525 + $0x68] sm:$0xff]
        %v1540 = vld [vmem:[%s1525 + $0x70] sm:$0xff]
        %v1541 = vld [vmem:[%s1525 + $0x78] sm:$0xff]
        %v1542 = vld [vmem:[%s1525 + $0x80] sm:$0xff]
        %v1543 = vld [vmem:[%s1525 + $0x88] sm:$0xff]
        %v1544 = vld [vmem:[%s1525 + $0x90] sm:$0xff]
        %v1545 = vld [vmem:[%s1525 + $0x98] sm:$0xff]
        %v1546 = vld [vmem:[%s1525 + $0xa0] sm:$0xff]
        %v1547 = vld [vmem:[%s1525 + $0xa8] sm:$0xff]
        %v1548 = vld [vmem:[%s1525 + $0xb0] sm:$0xff]
        %v1549 = vld [vmem:[%s1525 + $0xb8] sm:$0xff]
        %v1550 = vld [vmem:[%s1525 + $0xc0] sm:$0xff]
        %v1551 = vld [vmem:[%s1525 + $0xc8] sm:$0xff]
        %v1552 = vld [vmem:[%s1525 + $0xd0] sm:$0xff]
        %v1553 = vld [vmem:[%s1525 + $0xd8] sm:$0xff]
        %v1554 = vld [vmem:[%s1525 + $0xe0] sm:$0xff]
        %v1555 = vld [vmem:[%s1525 + $0xe8] sm:$0xff]
        %vm1556 = vcmask 1045504
        %v1557 = vrot.slane %v1292, 2
        %v1558 = vrot.slane %v1293, 2
        %v1559 = vsel %vm1556, %v1557, %v1558
        %v1560 = vsel %vm1338, %v1559, 0
        %1562 = vmatprep.subr.mxu0 0.0
        %1563 = vmatpush1.msra.mxu0 0.0
        %1564 = vmatprep.subr.mxu0 %v1555
        %1565 = vmatpush1.msra.mxu0 %v1554
        %1566 = vmatprep.subr.mxu0 %v1553
        %1567 = vmatpush1.msra.mxu0 %v1552
        %1568 = vmatprep.subr.mxu0 %v1551
        %1569 = vmatpush1.msra.mxu0 %v1550
        %1570 = vmatprep.subr.mxu0 %v1549
        %1571 = vmatpush1.msra.mxu0 %v1548
        %1572 = vmatprep.subr.mxu0 %v1547
        %1573 = vmatpush1.msra.mxu0 %v1546
        %1574 = vmatprep.subr.mxu0 %v1545
        %1575 = vmatpush1.msra.mxu0 %v1544
        %1576 = vmatprep.subr.mxu0 %v1543
        %1577 = vmatpush1.msra.mxu0 %v1542
        %1578 = vmatprep.subr.mxu0 %v1541
        %1579 = vmatpush1.msra.mxu0 %v1540
        %1580 = vmatprep.subr.mxu0 %v1539
        %1581 = vmatpush1.msra.mxu0 %v1538
        %1582 = vmatprep.subr.mxu0 %v1537
        %1583 = vmatpush1.msra.mxu0 %v1536
        %1584 = vmatprep.subr.mxu0 %v1535
        %1585 = vmatpush1.msra.mxu0 %v1534
        %1586 = vmatprep.subr.mxu0 %v1533
        %1587 = vmatpush1.msra.mxu0 %v1532
        %1588 = vmatprep.subr.mxu0 %v1531
        %1589 = vmatpush1.msra.mxu0 %v1530
        %1590 = vmatprep.subr.mxu0 %v1529
        %1591 = vmatpush1.msra.mxu0 %v1528
        %1592 = vmatprep.subr.mxu0 %v1527
        %1593 = vmatpush1.msra.mxu0 %v1526
        %1594 = vmatprep.subr.mxu0 0.0
        %1595 = vmatpush2.msra.mxu0 0.0
        %1596 = vmatprep.subr.mxu0 0.0
        %1597 = vmatpush2.msra.mxu0 0.0
        %1598 = vmatprep.subr.mxu0 0.0
        %1599 = vmatpush2.msra.mxu0 0.0
        %1600 = vmatprep.subr.mxu0 0.0
        %1601 = vmatpush2.msra.mxu0 0.0
        %1602 = vmatprep.subr.mxu0 0.0
        %1603 = vmatpush2.msra.mxu0 0.0
        %1604 = vmatprep.subr.mxu0 0.0
        %1605 = vmatpush2.msra.mxu0 0.0
        %1606 = vmatprep.subr.mxu0 0.0
        %1607 = vmatpush2.msra.mxu0 0.0
        %1608 = vmatprep.subr.mxu0 0.0
        %1609 = vmatpush2.msra.mxu0 0.0
        %1610 = vmatprep.subr.mxu0 0.0
        %1611 = vmatpush2.msra.mxu0 0.0
        %1612 = vmatprep.subr.mxu0 0.0
        %1613 = vmatpush2.msra.mxu0 0.0
        %1614 = vmatprep.subr.mxu0 0.0
        %1615 = vmatpush2.msra.mxu0 0.0
        %1616 = vmatprep.subr.mxu0 0.0
        %1617 = vmatpush2.msra.mxu0 0.0
        %1618 = vmatprep.subr.mxu0 0.0
        %1619 = vmatpush2.msra.mxu0 0.0
        %1620 = vmatprep.subr.mxu0 0.0
        %1621 = vmatpush2.msra.mxu0 0.0
        %1622 = vmatprep.subr.mxu0 0.0
        %1623 = vmatpush2.msra.mxu0 0.0
        %1624 = vmatprep.subr.mxu0 0.0
        %1625 = vmatpush2.msra.mxu0 0.0
        %1626 = vmatprep.mubr.f32.mxu0 0.0
        %1627 = vmatmul.mubr.f32.gmra.mxu0 %v1560
        %v1628 = vpop.f32.mrf.mxu0
        %v1629 = vadd.f32 0.0, %v1628
        %v1630 = vpop.f32.mrf.mxu0
        %v1631 = vadd.f32 0.0, %v1630
        %1632 = vdwg.mxu0
        %v1633 = vadd.f32 %v1523, %v1629
        %v1634 = vadd.f32 %v1524, %v1631
        %s1635 = scalar_lea.vmem %s5, 720
        %v1636 = vld [vmem:[%s1635] sm:$0xff]
        %v1637 = vld [vmem:[%s1635 + $0x8] sm:$0xff]
        %v1638 = vld [vmem:[%s1635 + $0x10] sm:$0xff]
        %v1639 = vld [vmem:[%s1635 + $0x18] sm:$0xff]
        %v1640 = vld [vmem:[%s1635 + $0x20] sm:$0xff]
        %v1641 = vld [vmem:[%s1635 + $0x28] sm:$0xff]
        %v1642 = vld [vmem:[%s1635 + $0x30] sm:$0xff]
        %v1643 = vld [vmem:[%s1635 + $0x38] sm:$0xff]
        %v1644 = vld [vmem:[%s1635 + $0x40] sm:$0xff]
        %v1645 = vld [vmem:[%s1635 + $0x48] sm:$0xff]
        %v1646 = vld [vmem:[%s1635 + $0x50] sm:$0xff]
        %v1647 = vld [vmem:[%s1635 + $0x58] sm:$0xff]
        %v1648 = vld [vmem:[%s1635 + $0x60] sm:$0xff]
        %v1649 = vld [vmem:[%s1635 + $0x68] sm:$0xff]
        %v1650 = vld [vmem:[%s1635 + $0x70] sm:$0xff]
        %v1651 = vld [vmem:[%s1635 + $0x78] sm:$0xff]
        %v1652 = vld [vmem:[%s1635 + $0x80] sm:$0xff]
        %v1653 = vld [vmem:[%s1635 + $0x88] sm:$0xff]
        %v1654 = vld [vmem:[%s1635 + $0x90] sm:$0xff]
        %v1655 = vld [vmem:[%s1635 + $0x98] sm:$0xff]
        %v1656 = vld [vmem:[%s1635 + $0xa0] sm:$0xff]
        %v1657 = vld [vmem:[%s1635 + $0xa8] sm:$0xff]
        %v1658 = vld [vmem:[%s1635 + $0xb0] sm:$0xff]
        %v1659 = vld [vmem:[%s1635 + $0xb8] sm:$0xff]
        %v1660 = vld [vmem:[%s1635 + $0xc0] sm:$0xff]
        %v1661 = vld [vmem:[%s1635 + $0xc8] sm:$0xff]
        %v1662 = vld [vmem:[%s1635 + $0xd0] sm:$0xff]
        %v1663 = vld [vmem:[%s1635 + $0xd8] sm:$0xff]
        %v1664 = vld [vmem:[%s1635 + $0xe0] sm:$0xff]
        %v1665 = vld [vmem:[%s1635 + $0xe8] sm:$0xff]
        %vm1666 = vcmask 1044480
        %v1667 = vrot.slane %v1292, 3
        %v1668 = vrot.slane %v1293, 3
        %v1669 = vsel %vm1666, %v1667, %v1668
        %v1670 = vsel %vm1338, %v1669, 0
        %1672 = vmatprep.subr.mxu0 0.0
        %1673 = vmatpush1.msra.mxu0 0.0
        %1674 = vmatprep.subr.mxu0 %v1665
        %1675 = vmatpush1.msra.mxu0 %v1664
        %1676 = vmatprep.subr.mxu0 %v1663
        %1677 = vmatpush1.msra.mxu0 %v1662
        %1678 = vmatprep.subr.mxu0 %v1661
        %1679 = vmatpush1.msra.mxu0 %v1660
        %1680 = vmatprep.subr.mxu0 %v1659
        %1681 = vmatpush1.msra.mxu0 %v1658
        %1682 = vmatprep.subr.mxu0 %v1657
        %1683 = vmatpush1.msra.mxu0 %v1656
        %1684 = vmatprep.subr.mxu0 %v1655
        %1685 = vmatpush1.msra.mxu0 %v1654
        %1686 = vmatprep.subr.mxu0 %v1653
        %1687 = vmatpush1.msra.mxu0 %v1652
        %1688 = vmatprep.subr.mxu0 %v1651
        %1689 = vmatpush1.msra.mxu0 %v1650
        %1690 = vmatprep.subr.mxu0 %v1649
        %1691 = vmatpush1.msra.mxu0 %v1648
        %1692 = vmatprep.subr.mxu0 %v1647
        %1693 = vmatpush1.msra.mxu0 %v1646
        %1694 = vmatprep.subr.mxu0 %v1645
        %1695 = vmatpush1.msra.mxu0 %v1644
        %1696 = vmatprep.subr.mxu0 %v1643
        %1697 = vmatpush1.msra.mxu0 %v1642
        %1698 = vmatprep.subr.mxu0 %v1641
        %1699 = vmatpush1.msra.mxu0 %v1640
        %1700 = vmatprep.subr.mxu0 %v1639
        %1701 = vmatpush1.msra.mxu0 %v1638
        %1702 = vmatprep.subr.mxu0 %v1637
        %1703 = vmatpush1.msra.mxu0 %v1636
        %1704 = vmatprep.subr.mxu0 0.0
        %1705 = vmatpush2.msra.mxu0 0.0
        %1706 = vmatprep.subr.mxu0 0.0
        %1707 = vmatpush2.msra.mxu0 0.0
        %1708 = vmatprep.subr.mxu0 0.0
        %1709 = vmatpush2.msra.mxu0 0.0
        %1710 = vmatprep.subr.mxu0 0.0
        %1711 = vmatpush2.msra.mxu0 0.0
        %1712 = vmatprep.subr.mxu0 0.0
        %1713 = vmatpush2.msra.mxu0 0.0
        %1714 = vmatprep.subr.mxu0 0.0
        %1715 = vmatpush2.msra.mxu0 0.0
        %1716 = vmatprep.subr.mxu0 0.0
        %1717 = vmatpush2.msra.mxu0 0.0
        %1718 = vmatprep.subr.mxu0 0.0
        %1719 = vmatpush2.msra.mxu0 0.0
        %1720 = vmatprep.subr.mxu0 0.0
        %1721 = vmatpush2.msra.mxu0 0.0
        %1722 = vmatprep.subr.mxu0 0.0
        %1723 = vmatpush2.msra.mxu0 0.0
        %1724 = vmatprep.subr.mxu0 0.0
        %1725 = vmatpush2.msra.mxu0 0.0
        %1726 = vmatprep.subr.mxu0 0.0
        %1727 = vmatpush2.msra.mxu0 0.0
        %1728 = vmatprep.subr.mxu0 0.0
        %1729 = vmatpush2.msra.mxu0 0.0
        %1730 = vmatprep.subr.mxu0 0.0
        %1731 = vmatpush2.msra.mxu0 0.0
        %1732 = vmatprep.subr.mxu0 0.0
        %1733 = vmatpush2.msra.mxu0 0.0
        %1734 = vmatprep.subr.mxu0 0.0
        %1735 = vmatpush2.msra.mxu0 0.0
        %1736 = vmatprep.mubr.f32.mxu0 0.0
        %1737 = vmatmul.mubr.f32.gmra.mxu0 %v1670
        %v1738 = vpop.f32.mrf.mxu0
        %v1739 = vadd.f32 0.0, %v1738
        %v1740 = vpop.f32.mrf.mxu0
        %v1741 = vadd.f32 0.0, %v1740
        %1742 = vdwg.mxu0
        %v1743 = vadd.f32 %v1633, %v1739
        %v1744 = vadd.f32 %v1634, %v1741
        %s1745 = scalar_lea.vmem %s5, 960
        %v1746 = vld [vmem:[%s1745] sm:$0xff]
        %v1747 = vld [vmem:[%s1745 + $0x8] sm:$0xff]
        %v1748 = vld [vmem:[%s1745 + $0x10] sm:$0xff]
        %v1749 = vld [vmem:[%s1745 + $0x18] sm:$0xff]
        %v1750 = vld [vmem:[%s1745 + $0x20] sm:$0xff]
        %v1751 = vld [vmem:[%s1745 + $0x28] sm:$0xff]
        %v1752 = vld [vmem:[%s1745 + $0x30] sm:$0xff]
        %v1753 = vld [vmem:[%s1745 + $0x38] sm:$0xff]
        %v1754 = vld [vmem:[%s1745 + $0x40] sm:$0xff]
        %v1755 = vld [vmem:[%s1745 + $0x48] sm:$0xff]
        %v1756 = vld [vmem:[%s1745 + $0x50] sm:$0xff]
        %v1757 = vld [vmem:[%s1745 + $0x58] sm:$0xff]
        %v1758 = vld [vmem:[%s1745 + $0x60] sm:$0xff]
        %v1759 = vld [vmem:[%s1745 + $0x68] sm:$0xff]
        %v1760 = vld [vmem:[%s1745 + $0x70] sm:$0xff]
        %v1761 = vld [vmem:[%s1745 + $0x78] sm:$0xff]
        %v1762 = vld [vmem:[%s1745 + $0x80] sm:$0xff]
        %v1763 = vld [vmem:[%s1745 + $0x88] sm:$0xff]
        %v1764 = vld [vmem:[%s1745 + $0x90] sm:$0xff]
        %v1765 = vld [vmem:[%s1745 + $0x98] sm:$0xff]
        %v1766 = vld [vmem:[%s1745 + $0xa0] sm:$0xff]
        %v1767 = vld [vmem:[%s1745 + $0xa8] sm:$0xff]
        %v1768 = vld [vmem:[%s1745 + $0xb0] sm:$0xff]
        %v1769 = vld [vmem:[%s1745 + $0xb8] sm:$0xff]
        %v1770 = vld [vmem:[%s1745 + $0xc0] sm:$0xff]
        %v1771 = vld [vmem:[%s1745 + $0xc8] sm:$0xff]
        %v1772 = vld [vmem:[%s1745 + $0xd0] sm:$0xff]
        %v1773 = vld [vmem:[%s1745 + $0xd8] sm:$0xff]
        %v1774 = vld [vmem:[%s1745 + $0xe0] sm:$0xff]
        %v1775 = vld [vmem:[%s1745 + $0xe8] sm:$0xff]
        %v1776 = vrot.slane %v1292, 4
        %v1777 = vrot.slane %v1293, 4
        %v1778 = vsel %vm473, %v1776, %v1777
        %v1779 = vsel %vm1338, %v1778, 0
        %1781 = vmatprep.subr.mxu0 0.0
        %1782 = vmatpush1.msra.mxu0 0.0
        %1783 = vmatprep.subr.mxu0 %v1775
        %1784 = vmatpush1.msra.mxu0 %v1774
        %1785 = vmatprep.subr.mxu0 %v1773
        %1786 = vmatpush1.msra.mxu0 %v1772
        %1787 = vmatprep.subr.mxu0 %v1771
        %1788 = vmatpush1.msra.mxu0 %v1770
        %1789 = vmatprep.subr.mxu0 %v1769
        %1790 = vmatpush1.msra.mxu0 %v1768
        %1791 = vmatprep.subr.mxu0 %v1767
        %1792 = vmatpush1.msra.mxu0 %v1766
        %1793 = vmatprep.subr.mxu0 %v1765
        %1794 = vmatpush1.msra.mxu0 %v1764
        %1795 = vmatprep.subr.mxu0 %v1763
        %1796 = vmatpush1.msra.mxu0 %v1762
        %1797 = vmatprep.subr.mxu0 %v1761
        %1798 = vmatpush1.msra.mxu0 %v1760
        %1799 = vmatprep.subr.mxu0 %v1759
        %1800 = vmatpush1.msra.mxu0 %v1758
        %1801 = vmatprep.subr.mxu0 %v1757
        %1802 = vmatpush1.msra.mxu0 %v1756
        %1803 = vmatprep.subr.mxu0 %v1755
        %1804 = vmatpush1.msra.mxu0 %v1754
        %1805 = vmatprep.subr.mxu0 %v1753
        %1806 = vmatpush1.msra.mxu0 %v1752
        %1807 = vmatprep.subr.mxu0 %v1751
        %1808 = vmatpush1.msra.mxu0 %v1750
        %1809 = vmatprep.subr.mxu0 %v1749
        %1810 = vmatpush1.msra.mxu0 %v1748
        %1811 = vmatprep.subr.mxu0 %v1747
        %1812 = vmatpush1.msra.mxu0 %v1746
        %1813 = vmatprep.subr.mxu0 0.0
        %1814 = vmatpush2.msra.mxu0 0.0
        %1815 = vmatprep.subr.mxu0 0.0
        %1816 = vmatpush2.msra.mxu0 0.0
        %1817 = vmatprep.subr.mxu0 0.0
        %1818 = vmatpush2.msra.mxu0 0.0
        %1819 = vmatprep.subr.mxu0 0.0
        %1820 = vmatpush2.msra.mxu0 0.0
        %1821 = vmatprep.subr.mxu0 0.0
        %1822 = vmatpush2.msra.mxu0 0.0
        %1823 = vmatprep.subr.mxu0 0.0
        %1824 = vmatpush2.msra.mxu0 0.0
        %1825 = vmatprep.subr.mxu0 0.0
        %1826 = vmatpush2.msra.mxu0 0.0
        %1827 = vmatprep.subr.mxu0 0.0
        %1828 = vmatpush2.msra.mxu0 0.0
        %1829 = vmatprep.subr.mxu0 0.0
        %1830 = vmatpush2.msra.mxu0 0.0
        %1831 = vmatprep.subr.mxu0 0.0
        %1832 = vmatpush2.msra.mxu0 0.0
        %1833 = vmatprep.subr.mxu0 0.0
        %1834 = vmatpush2.msra.mxu0 0.0
        %1835 = vmatprep.subr.mxu0 0.0
        %1836 = vmatpush2.msra.mxu0 0.0
        %1837 = vmatprep.subr.mxu0 0.0
        %1838 = vmatpush2.msra.mxu0 0.0
        %1839 = vmatprep.subr.mxu0 0.0
        %1840 = vmatpush2.msra.mxu0 0.0
        %1841 = vmatprep.subr.mxu0 0.0
        %1842 = vmatpush2.msra.mxu0 0.0
        %1843 = vmatprep.subr.mxu0 0.0
        %1844 = vmatpush2.msra.mxu0 0.0
        %1845 = vmatprep.mubr.f32.mxu0 0.0
        %1846 = vmatmul.mubr.f32.gmra.mxu0 %v1779
        %v1847 = vpop.f32.mrf.mxu0
        %v1848 = vadd.f32 0.0, %v1847
        %v1849 = vpop.f32.mrf.mxu0
        %v1850 = vadd.f32 0.0, %v1849
        %1851 = vdwg.mxu0
        %v1852 = vadd.f32 %v1743, %v1848
        %v1853 = vadd.f32 %v1744, %v1850
        %v1856 = vrot.slane %v1852, 1
        %v1857 = vrot.slane %v1853, 1
        %v1860 = vmax.f32 %v1852, %v1856
        %v1861 = vmax.f32 %v1853, %v1857
        %v1862 = vld [vmem:[%s7] sm:$0xf]
        %vm1863 = vcmask 56320
        %v1865 = vsel %vm1863, %v1862, 0
        %v1868 = vsel %vm1039, %v1860, 0
        %v1871 = vsel %vm1039, %v1861, 0
        %1873 = vmatprep.subr.mxu0 0.0
        %1874 = vmatpush1.msra.mxu0 0.0
        %1875 = vmatprep.subr.mxu0 0.0
        %1876 = vmatpush1.msra.mxu0 0.0
        %1877 = vmatprep.subr.mxu0 0.0
        %1878 = vmatpush1.msra.mxu0 0.0
        %1879 = vmatprep.subr.mxu0 0.0
        %1880 = vmatpush1.msra.mxu0 0.0
        %1881 = vmatprep.subr.mxu0 0.0
        %1882 = vmatpush1.msra.mxu0 0.0
        %1883 = vmatprep.subr.mxu0 0.0
        %1884 = vmatpush1.msra.mxu0 0.0
        %1885 = vmatprep.subr.mxu0 0.0
        %1886 = vmatpush1.msra.mxu0 0.0
        %1887 = vmatprep.subr.mxu0 0.0
        %1888 = vmatpush1.msra.mxu0 0.0
        %1889 = vmatprep.subr.mxu0 0.0
        %1890 = vmatpush1.msra.mxu0 0.0
        %1891 = vmatprep.subr.mxu0 0.0
        %1892 = vmatpush1.msra.mxu0 0.0
        %1893 = vmatprep.subr.mxu0 0.0
        %1894 = vmatpush1.msra.mxu0 0.0
        %1895 = vmatprep.subr.mxu0 0.0
        %1896 = vmatpush1.msra.mxu0 0.0
        %1897 = vmatprep.subr.mxu0 0.0
        %1898 = vmatpush1.msra.mxu0 0.0
        %1899 = vmatprep.subr.mxu0 0.0
        %1900 = vmatpush1.msra.mxu0 0.0
        %1901 = vmatprep.subr.mxu0 0.0
        %1902 = vmatpush1.msra.mxu0 0.0
        %1903 = vmatprep.subr.mxu0 %v1871
        %1904 = vmatpush1.msra.mxu0 %v1868
        %1905 = vmatprep.subr.mxu0 0.0
        %1906 = vmatpush2.msra.mxu0 0.0
        %1907 = vmatprep.subr.mxu0 0.0
        %1908 = vmatpush2.msra.mxu0 0.0
        %1909 = vmatprep.subr.mxu0 0.0
        %1910 = vmatpush2.msra.mxu0 0.0
        %1911 = vmatprep.subr.mxu0 0.0
        %1912 = vmatpush2.msra.mxu0 0.0
        %1913 = vmatprep.subr.mxu0 0.0
        %1914 = vmatpush2.msra.mxu0 0.0
        %1915 = vmatprep.subr.mxu0 0.0
        %1916 = vmatpush2.msra.mxu0 0.0
        %1917 = vmatprep.subr.mxu0 0.0
        %1918 = vmatpush2.msra.mxu0 0.0
        %1919 = vmatprep.subr.mxu0 0.0
        %1920 = vmatpush2.msra.mxu0 0.0
        %1921 = vmatprep.subr.mxu0 0.0
        %1922 = vmatpush2.msra.mxu0 0.0
        %1923 = vmatprep.subr.mxu0 0.0
        %1924 = vmatpush2.msra.mxu0 0.0
        %1925 = vmatprep.subr.mxu0 0.0
        %1926 = vmatpush2.msra.mxu0 0.0
        %1927 = vmatprep.subr.mxu0 0.0
        %1928 = vmatpush2.msra.mxu0 0.0
        %1929 = vmatprep.subr.mxu0 0.0
        %1930 = vmatpush2.msra.mxu0 0.0
        %1931 = vmatprep.subr.mxu0 0.0
        %1932 = vmatpush2.msra.mxu0 0.0
        %1933 = vmatprep.subr.mxu0 0.0
        %1934 = vmatpush2.msra.mxu0 0.0
        %1935 = vmatprep.subr.mxu0 0.0
        %1936 = vmatpush2.msra.mxu0 0.0
        %1937 = vmatprep.mubr.f32.mxu0 0.0
        %1938 = vmatmul.mubr.f32.gmra.mxu0 %v1865
        %v1939 = vpop.f32.mrf.mxu0
        %v1940 = vadd.f32 0.0, %v1939
        %v1941 = vpop.f32.mrf.mxu0
        %v1942 = vadd.f32 0.0, %v1941
        %1943 = vdwg.mxu0
        %1946 = vrot.lane.b32.xlu0 %v1940, 127
        %v1947 = vpop.permute.xlu0 %1946
        %1948 = vrot.lane.b32.xlu0 %v1942, 127
        %v1949 = vpop.permute.xlu0 %1948
        %v1950 = vsel %vm1166, %v1947, %v1949
        %v1953 = vmax.f32 %v1940, %v1950
        %v1954 = vmax.f32 %v1942, %v1949
        %v1955 = vld [vmem:[%s8] sm:$0xff]
        %v1956 = vld [vmem:[%s8 + $0x8] sm:$0xff]
        %v1957 = vld [vmem:[%s8 + $0x10] sm:$0xff]
        %v1958 = vld [vmem:[%s8 + $0x18] sm:$0xff]
        %v1959 = vld [vmem:[%s8 + $0x20] sm:$0xff]
        %v1960 = vld [vmem:[%s8 + $0x28] sm:$0xff]
        %v1961 = vld [vmem:[%s8 + $0x30] sm:$0xff]
        %v1962 = vld [vmem:[%s8 + $0x38] sm:$0xff]
        %v1963 = vld [vmem:[%s8 + $0x40] sm:$0xff]
        %v1964 = vld [vmem:[%s8 + $0x48] sm:$0xff]
        %v1965 = vld [vmem:[%s8 + $0x50] sm:$0xff]
        %v1966 = vld [vmem:[%s8 + $0x58] sm:$0xff]
        %v1967 = vld [vmem:[%s8 + $0x60] sm:$0xff]
        %v1968 = vld [vmem:[%s8 + $0x68] sm:$0xff]
        %v1969 = vld [vmem:[%s8 + $0x70] sm:$0xff]
        %v1970 = vld [vmem:[%s8 + $0x78] sm:$0xff]
        %v1971 = vld [vmem:[%s8 + $0x80] sm:$0xff]
        %v1972 = vld [vmem:[%s8 + $0x88] sm:$0xff]
        %v1973 = vld [vmem:[%s8 + $0x90] sm:$0xff]
        %v1974 = vld [vmem:[%s8 + $0x98] sm:$0x7f]
        %vm1975 = vcmask 252928
        %v1977 = vsel %vm1975, %v1954, 0
        %v1980 = vsel %vm1039, %v1974, 0
        %1982 = vmatprep.subr.mxu0 0.0
        %1983 = vmatpush1.msra.mxu0 %v1970
        %1984 = vmatprep.subr.mxu0 0.0
        %1985 = vmatpush1.msra.mxu0 %v1969
        %1986 = vmatprep.subr.mxu0 0.0
        %1987 = vmatpush1.msra.mxu0 %v1968
        %1988 = vmatprep.subr.mxu0 0.0
        %1989 = vmatpush1.msra.mxu0 %v1967
        %1990 = vmatprep.subr.mxu0 0.0
        %1991 = vmatpush1.msra.mxu0 %v1966
        %1992 = vmatprep.subr.mxu0 0.0
        %1993 = vmatpush1.msra.mxu0 %v1965
        %1994 = vmatprep.subr.mxu0 0.0
        %1995 = vmatpush1.msra.mxu0 %v1964
        %1996 = vmatprep.subr.mxu0 0.0
        %1997 = vmatpush1.msra.mxu0 %v1963
        %1998 = vmatprep.subr.mxu0 0.0
        %1999 = vmatpush1.msra.mxu0 %v1962
        %2000 = vmatprep.subr.mxu0 0.0
        %2001 = vmatpush1.msra.mxu0 %v1961
        %2002 = vmatprep.subr.mxu0 0.0
        %2003 = vmatpush1.msra.mxu0 %v1960
        %2004 = vmatprep.subr.mxu0 0.0
        %2005 = vmatpush1.msra.mxu0 %v1959
        %2006 = vmatprep.subr.mxu0 0.0
        %2007 = vmatpush1.msra.mxu0 %v1958
        %2008 = vmatprep.subr.mxu0 0.0
        %2009 = vmatpush1.msra.mxu0 %v1957
        %2010 = vmatprep.subr.mxu0 0.0
        %2011 = vmatpush1.msra.mxu0 %v1956
        %2012 = vmatprep.subr.mxu0 0.0
        %2013 = vmatpush1.msra.mxu0 %v1955
        %2014 = vmatprep.subr.mxu0 0.0
        %2015 = vmatpush2.msra.mxu0 0.0
        %2016 = vmatprep.subr.mxu0 0.0
        %2017 = vmatpush2.msra.mxu0 0.0
        %2018 = vmatprep.subr.mxu0 0.0
        %2019 = vmatpush2.msra.mxu0 0.0
        %2020 = vmatprep.subr.mxu0 0.0
        %2021 = vmatpush2.msra.mxu0 0.0
        %2022 = vmatprep.subr.mxu0 0.0
        %2023 = vmatpush2.msra.mxu0 0.0
        %2024 = vmatprep.subr.mxu0 0.0
        %2025 = vmatpush2.msra.mxu0 0.0
        %2026 = vmatprep.subr.mxu0 0.0
        %2027 = vmatpush2.msra.mxu0 0.0
        %2028 = vmatprep.subr.mxu0 0.0
        %2029 = vmatpush2.msra.mxu0 0.0
        %2030 = vmatprep.subr.mxu0 0.0
        %2031 = vmatpush2.msra.mxu0 0.0
        %2032 = vmatprep.subr.mxu0 0.0
        %2033 = vmatpush2.msra.mxu0 0.0
        %2034 = vmatprep.subr.mxu0 0.0
        %2035 = vmatpush2.msra.mxu0 0.0
        %2036 = vmatprep.subr.mxu0 0.0
        %2037 = vmatpush2.msra.mxu0 0.0
        %2038 = vmatprep.subr.mxu0 0.0
        %2039 = vmatpush2.msra.mxu0 %v1980
        %2040 = vmatprep.subr.mxu0 0.0
        %2041 = vmatpush2.msra.mxu0 %v1973
        %2042 = vmatprep.subr.mxu0 0.0
        %2043 = vmatpush2.msra.mxu0 %v1972
        %2044 = vmatprep.subr.mxu0 0.0
        %2045 = vmatpush2.msra.mxu0 %v1971
        %2046 = vmatprep.mubr.f32.mxu0 %v1977
        %2047 = vmatmul.mubr.f32.gmra.mxu0 %v1953
        %v2048 = vpop.f32.mrf.mxu0
        %v2049 = vadd.f32 0.0, %v2048
        %v2050 = vpop.f32.mrf.mxu0
        %2051 = vdwg.mxu0
        %v2052 = vmax.f32 %v2049, 0.0
        %v2053 = vld [vmem:[%s9] sm:$0xff]
        %v2054 = vld [vmem:[%s9 + $0x8] sm:$0xff]
        %v2055 = vld [vmem:[%s9 + $0x10] sm:$0xff]
        %v2056 = vld [vmem:[%s9 + $0x18] sm:$0xff]
        %v2057 = vld [vmem:[%s9 + $0x20] sm:$0xff]
        %v2058 = vld [vmem:[%s9 + $0x28] sm:$0xff]
        %v2059 = vld [vmem:[%s9 + $0x30] sm:$0xff]
        %v2060 = vld [vmem:[%s9 + $0x38] sm:$0xff]
        %v2061 = vld [vmem:[%s9 + $0x40] sm:$0xff]
        %v2062 = vld [vmem:[%s9 + $0x48] sm:$0xff]
        %s2063 = scalar_lea.vmem %s9, 80
        %v2064 = vld [vmem:[%s2063] sm:$0xff]
        %v2065 = vld [vmem:[%s2063 + $0x8] sm:$0xff]
        %v2066 = vld [vmem:[%s2063 + $0x10] sm:$0xff]
        %v2067 = vld [vmem:[%s2063 + $0x18] sm:$0xff]
        %v2068 = vld [vmem:[%s2063 + $0x20] sm:$0xff]
        %v2069 = vld [vmem:[%s2063 + $0x28] sm:$0xff]
        %v2070 = vld [vmem:[%s2063 + $0x30] sm:$0xff]
        %v2071 = vld [vmem:[%s2063 + $0x38] sm:$0xff]
        %v2072 = vld [vmem:[%s2063 + $0x40] sm:$0xff]
        %v2073 = vld [vmem:[%s2063 + $0x48] sm:$0xff]
        %v2075 = vrot.slane %v2052, 1
        %vm2076 = vcmask 654336
        %v2077 = vsel %vm2076, %v2075, 0
        %2079 = vmatprep.subr.mxu0 0.0
        %2080 = vmatpush1.msra.mxu0 0.0
        %2081 = vmatprep.subr.mxu0 0.0
        %2082 = vmatpush1.msra.mxu0 0.0
        %2083 = vmatprep.subr.mxu0 0.0
        %2084 = vmatpush1.msra.mxu0 0.0
        %2085 = vmatprep.subr.mxu0 0.0
        %2086 = vmatpush1.msra.mxu0 0.0
        %2087 = vmatprep.subr.mxu0 0.0
        %2088 = vmatpush1.msra.mxu0 0.0
        %2089 = vmatprep.subr.mxu0 0.0
        %2090 = vmatpush1.msra.mxu0 0.0
        %2091 = vmatprep.subr.mxu0 0.0
        %2092 = vmatpush1.msra.mxu0 %v2073
        %2093 = vmatprep.subr.mxu0 0.0
        %2094 = vmatpush1.msra.mxu0 %v2072
        %2095 = vmatprep.subr.mxu0 0.0
        %2096 = vmatpush1.msra.mxu0 %v2071
        %2097 = vmatprep.subr.mxu0 0.0
        %2098 = vmatpush1.msra.mxu0 %v2070
        %2099 = vmatprep.subr.mxu0 0.0
        %2100 = vmatpush1.msra.mxu0 %v2069
        %2101 = vmatprep.subr.mxu0 0.0
        %2102 = vmatpush1.msra.mxu0 %v2068
        %2103 = vmatprep.subr.mxu0 0.0
        %2104 = vmatpush1.msra.mxu0 %v2067
        %2105 = vmatprep.subr.mxu0 0.0
        %2106 = vmatpush1.msra.mxu0 %v2066
        %2107 = vmatprep.subr.mxu0 0.0
        %2108 = vmatpush1.msra.mxu0 %v2065
        %2109 = vmatprep.subr.mxu0 0.0
        %2110 = vmatpush1.msra.mxu0 %v2064
        %2111 = vmatprep.subr.mxu0 0.0
        %2112 = vmatpush2.msra.mxu0 0.0
        %2113 = vmatprep.subr.mxu0 0.0
        %2114 = vmatpush2.msra.mxu0 0.0
        %2115 = vmatprep.subr.mxu0 0.0
        %2116 = vmatpush2.msra.mxu0 0.0
        %2117 = vmatprep.subr.mxu0 0.0
        %2118 = vmatpush2.msra.mxu0 0.0
        %2119 = vmatprep.subr.mxu0 0.0
        %2120 = vmatpush2.msra.mxu0 0.0
        %2121 = vmatprep.subr.mxu0 0.0
        %2122 = vmatpush2.msra.mxu0 0.0
        %2123 = vmatprep.subr.mxu0 0.0
        %2124 = vmatpush2.msra.mxu0 0.0
        %2125 = vmatprep.subr.mxu0 0.0
        %2126 = vmatpush2.msra.mxu0 0.0
        %2127 = vmatprep.subr.mxu0 0.0
        %2128 = vmatpush2.msra.mxu0 0.0
        %2129 = vmatprep.subr.mxu0 0.0
        %2130 = vmatpush2.msra.mxu0 0.0
        %2131 = vmatprep.subr.mxu0 0.0
        %2132 = vmatpush2.msra.mxu0 0.0
        %2133 = vmatprep.subr.mxu0 0.0
        %2134 = vmatpush2.msra.mxu0 0.0
        %2135 = vmatprep.subr.mxu0 0.0
        %2136 = vmatpush2.msra.mxu0 0.0
        %2137 = vmatprep.subr.mxu0 0.0
        %2138 = vmatpush2.msra.mxu0 0.0
        %2139 = vmatprep.subr.mxu0 0.0
        %2140 = vmatpush2.msra.mxu0 0.0
        %2141 = vmatprep.subr.mxu0 0.0
        %2142 = vmatpush2.msra.mxu0 0.0
        %2143 = vmatprep.mubr.f32.mxu0 0.0
        %2144 = vmatmul.mubr.f32.gmra.mxu0 %v2077
        %v2145 = vpop.f32.mrf.mxu0
        %v2146 = vadd.f32 0.0, %v2145
        %v2147 = vpop.f32.mrf.mxu0
        %2148 = vdwg.mxu0
        %v2149 = vsel %vm2076, %v2052, 0
        %2151 = vmatprep.subr.mxu0 0.0
        %2152 = vmatpush1.msra.mxu0 0.0
        %2153 = vmatprep.subr.mxu0 0.0
        %2154 = vmatpush1.msra.mxu0 0.0
        %2155 = vmatprep.subr.mxu0 0.0
        %2156 = vmatpush1.msra.mxu0 0.0
        %2157 = vmatprep.subr.mxu0 0.0
        %2158 = vmatpush1.msra.mxu0 0.0
        %2159 = vmatprep.subr.mxu0 0.0
        %2160 = vmatpush1.msra.mxu0 0.0
        %2161 = vmatprep.subr.mxu0 0.0
        %2162 = vmatpush1.msra.mxu0 0.0
        %2163 = vmatprep.subr.mxu0 0.0
        %2164 = vmatpush1.msra.mxu0 %v2062
        %2165 = vmatprep.subr.mxu0 0.0
        %2166 = vmatpush1.msra.mxu0 %v2061
        %2167 = vmatprep.subr.mxu0 0.0
        %2168 = vmatpush1.msra.mxu0 %v2060
        %2169 = vmatprep.subr.mxu0 0.0
        %2170 = vmatpush1.msra.mxu0 %v2059
        %2171 = vmatprep.subr.mxu0 0.0
        %2172 = vmatpush1.msra.mxu0 %v2058
        %2173 = vmatprep.subr.mxu0 0.0
        %2174 = vmatpush1.msra.mxu0 %v2057
        %2175 = vmatprep.subr.mxu0 0.0
        %2176 = vmatpush1.msra.mxu0 %v2056
        %2177 = vmatprep.subr.mxu0 0.0
        %2178 = vmatpush1.msra.mxu0 %v2055
        %2179 = vmatprep.subr.mxu0 0.0
        %2180 = vmatpush1.msra.mxu0 %v2054
        %2181 = vmatprep.subr.mxu0 0.0
        %2182 = vmatpush1.msra.mxu0 %v2053
        %2183 = vmatprep.subr.mxu0 0.0
        %2184 = vmatpush2.msra.mxu0 0.0
        %2185 = vmatprep.subr.mxu0 0.0
        %2186 = vmatpush2.msra.mxu0 0.0
        %2187 = vmatprep.subr.mxu0 0.0
        %2188 = vmatpush2.msra.mxu0 0.0
        %2189 = vmatprep.subr.mxu0 0.0
        %2190 = vmatpush2.msra.mxu0 0.0
        %2191 = vmatprep.subr.mxu0 0.0
        %2192 = vmatpush2.msra.mxu0 0.0
        %2193 = vmatprep.subr.mxu0 0.0
        %2194 = vmatpush2.msra.mxu0 0.0
        %2195 = vmatprep.subr.mxu0 0.0
        %2196 = vmatpush2.msra.mxu0 0.0
        %2197 = vmatprep.subr.mxu0 0.0
        %2198 = vmatpush2.msra.mxu0 0.0
        %2199 = vmatprep.subr.mxu0 0.0
        %2200 = vmatpush2.msra.mxu0 0.0
        %2201 = vmatprep.subr.mxu0 0.0
        %2202 = vmatpush2.msra.mxu0 0.0
        %2203 = vmatprep.subr.mxu0 0.0
        %2204 = vmatpush2.msra.mxu0 0.0
        %2205 = vmatprep.subr.mxu0 0.0
        %2206 = vmatpush2.msra.mxu0 0.0
        %2207 = vmatprep.subr.mxu0 0.0
        %2208 = vmatpush2.msra.mxu0 0.0
        %2209 = vmatprep.subr.mxu0 0.0
        %2210 = vmatpush2.msra.mxu0 0.0
        %2211 = vmatprep.subr.mxu0 0.0
        %2212 = vmatpush2.msra.mxu0 0.0
        %2213 = vmatprep.subr.mxu0 0.0
        %2214 = vmatpush2.msra.mxu0 0.0
        %2215 = vmatprep.mubr.f32.mxu0 0.0
        %2216 = vmatmul.mubr.f32.gmra.mxu0 %v2149
        %v2217 = vpop.f32.mrf.mxu0
        %v2218 = vadd.f32 %v2146, %v2217
        %v2219 = vpop.f32.mrf.mxu0
        %2220 = vdwg.mxu0
        %s2221 = scalar_lea.vmem %s9, 160
        %v2222 = vld [vmem:[%s2221] sm:$0xff]
        %v2223 = vld [vmem:[%s2221 + $0x8] sm:$0xff]
        %v2224 = vld [vmem:[%s2221 + $0x10] sm:$0xff]
        %v2225 = vld [vmem:[%s2221 + $0x18] sm:$0xff]
        %v2226 = vld [vmem:[%s2221 + $0x20] sm:$0xff]
        %v2227 = vld [vmem:[%s2221 + $0x28] sm:$0xff]
        %v2228 = vld [vmem:[%s2221 + $0x30] sm:$0xff]
        %v2229 = vld [vmem:[%s2221 + $0x38] sm:$0xff]
        %v2230 = vld [vmem:[%s2221 + $0x40] sm:$0xff]
        %v2231 = vld [vmem:[%s2221 + $0x48] sm:$0xff]
        %v2232 = vrot.slane %v2052, 2
        %v2233 = vsel %vm2076, %v2232, 0
        %2235 = vmatprep.subr.mxu0 0.0
        %2236 = vmatpush1.msra.mxu0 0.0
        %2237 = vmatprep.subr.mxu0 0.0
        %2238 = vmatpush1.msra.mxu0 0.0
        %2239 = vmatprep.subr.mxu0 0.0
        %2240 = vmatpush1.msra.mxu0 0.0
        %2241 = vmatprep.subr.mxu0 0.0
        %2242 = vmatpush1.msra.mxu0 0.0
        %2243 = vmatprep.subr.mxu0 0.0
        %2244 = vmatpush1.msra.mxu0 0.0
        %2245 = vmatprep.subr.mxu0 0.0
        %2246 = vmatpush1.msra.mxu0 0.0
        %2247 = vmatprep.subr.mxu0 0.0
        %2248 = vmatpush1.msra.mxu0 %v2231
        %2249 = vmatprep.subr.mxu0 0.0
        %2250 = vmatpush1.msra.mxu0 %v2230
        %2251 = vmatprep.subr.mxu0 0.0
        %2252 = vmatpush1.msra.mxu0 %v2229
        %2253 = vmatprep.subr.mxu0 0.0
        %2254 = vmatpush1.msra.mxu0 %v2228
        %2255 = vmatprep.subr.mxu0 0.0
        %2256 = vmatpush1.msra.mxu0 %v2227
        %2257 = vmatprep.subr.mxu0 0.0
        %2258 = vmatpush1.msra.mxu0 %v2226
        %2259 = vmatprep.subr.mxu0 0.0
        %2260 = vmatpush1.msra.mxu0 %v2225
        %2261 = vmatprep.subr.mxu0 0.0
        %2262 = vmatpush1.msra.mxu0 %v2224
        %2263 = vmatprep.subr.mxu0 0.0
        %2264 = vmatpush1.msra.mxu0 %v2223
        %2265 = vmatprep.subr.mxu0 0.0
        %2266 = vmatpush1.msra.mxu0 %v2222
        %2267 = vmatprep.subr.mxu0 0.0
        %2268 = vmatpush2.msra.mxu0 0.0
        %2269 = vmatprep.subr.mxu0 0.0
        %2270 = vmatpush2.msra.mxu0 0.0
        %2271 = vmatprep.subr.mxu0 0.0
        %2272 = vmatpush2.msra.mxu0 0.0
        %2273 = vmatprep.subr.mxu0 0.0
        %2274 = vmatpush2.msra.mxu0 0.0
        %2275 = vmatprep.subr.mxu0 0.0
        %2276 = vmatpush2.msra.mxu0 0.0
        %2277 = vmatprep.subr.mxu0 0.0
        %2278 = vmatpush2.msra.mxu0 0.0
        %2279 = vmatprep.subr.mxu0 0.0
        %2280 = vmatpush2.msra.mxu0 0.0
        %2281 = vmatprep.subr.mxu0 0.0
        %2282 = vmatpush2.msra.mxu0 0.0
        %2283 = vmatprep.subr.mxu0 0.0
        %2284 = vmatpush2.msra.mxu0 0.0
        %2285 = vmatprep.subr.mxu0 0.0
        %2286 = vmatpush2.msra.mxu0 0.0
        %2287 = vmatprep.subr.mxu0 0.0
        %2288 = vmatpush2.msra.mxu0 0.0
        %2289 = vmatprep.subr.mxu0 0.0
        %2290 = vmatpush2.msra.mxu0 0.0
        %2291 = vmatprep.subr.mxu0 0.0
        %2292 = vmatpush2.msra.mxu0 0.0
        %2293 = vmatprep.subr.mxu0 0.0
        %2294 = vmatpush2.msra.mxu0 0.0
        %2295 = vmatprep.subr.mxu0 0.0
        %2296 = vmatpush2.msra.mxu0 0.0
        %2297 = vmatprep.subr.mxu0 0.0
        %2298 = vmatpush2.msra.mxu0 0.0
        %2299 = vmatprep.mubr.f32.mxu0 0.0
        %2300 = vmatmul.mubr.f32.gmra.mxu0 %v2233
        %v2301 = vpop.f32.mrf.mxu0
        %v2302 = vadd.f32 0.0, %v2301
        %v2303 = vpop.f32.mrf.mxu0
        %2304 = vdwg.mxu0
        %v2305 = vadd.f32 %v2218, %v2302
        %s2306 = scalar_lea.vmem %s9, 240
        %v2307 = vld [vmem:[%s2306] sm:$0xff]
        %v2308 = vld [vmem:[%s2306 + $0x8] sm:$0xff]
        %v2309 = vld [vmem:[%s2306 + $0x10] sm:$0xff]
        %v2310 = vld [vmem:[%s2306 + $0x18] sm:$0xff]
        %v2311 = vld [vmem:[%s2306 + $0x20] sm:$0xff]
        %v2312 = vld [vmem:[%s2306 + $0x28] sm:$0xff]
        %v2313 = vld [vmem:[%s2306 + $0x30] sm:$0xff]
        %v2314 = vld [vmem:[%s2306 + $0x38] sm:$0xff]
        %v2315 = vld [vmem:[%s2306 + $0x40] sm:$0xff]
        %v2316 = vld [vmem:[%s2306 + $0x48] sm:$0xff]
        %v2317 = vrot.slane %v2052, 3
        %v2318 = vsel %vm2076, %v2317, 0
        %2320 = vmatprep.subr.mxu0 0.0
        %2321 = vmatpush1.msra.mxu0 0.0
        %2322 = vmatprep.subr.mxu0 0.0
        %2323 = vmatpush1.msra.mxu0 0.0
        %2324 = vmatprep.subr.mxu0 0.0
        %2325 = vmatpush1.msra.mxu0 0.0
        %2326 = vmatprep.subr.mxu0 0.0
        %2327 = vmatpush1.msra.mxu0 0.0
        %2328 = vmatprep.subr.mxu0 0.0
        %2329 = vmatpush1.msra.mxu0 0.0
        %2330 = vmatprep.subr.mxu0 0.0
        %2331 = vmatpush1.msra.mxu0 0.0
        %2332 = vmatprep.subr.mxu0 0.0
        %2333 = vmatpush1.msra.mxu0 %v2316
        %2334 = vmatprep.subr.mxu0 0.0
        %2335 = vmatpush1.msra.mxu0 %v2315
        %2336 = vmatprep.subr.mxu0 0.0
        %2337 = vmatpush1.msra.mxu0 %v2314
        %2338 = vmatprep.subr.mxu0 0.0
        %2339 = vmatpush1.msra.mxu0 %v2313
        %2340 = vmatprep.subr.mxu0 0.0
        %2341 = vmatpush1.msra.mxu0 %v2312
        %2342 = vmatprep.subr.mxu0 0.0
        %2343 = vmatpush1.msra.mxu0 %v2311
        %2344 = vmatprep.subr.mxu0 0.0
        %2345 = vmatpush1.msra.mxu0 %v2310
        %2346 = vmatprep.subr.mxu0 0.0
        %2347 = vmatpush1.msra.mxu0 %v2309
        %2348 = vmatprep.subr.mxu0 0.0
        %2349 = vmatpush1.msra.mxu0 %v2308
        %2350 = vmatprep.subr.mxu0 0.0
        %2351 = vmatpush1.msra.mxu0 %v2307
        %2352 = vmatprep.subr.mxu0 0.0
        %2353 = vmatpush2.msra.mxu0 0.0
        %2354 = vmatprep.subr.mxu0 0.0
        %2355 = vmatpush2.msra.mxu0 0.0
        %2356 = vmatprep.subr.mxu0 0.0
        %2357 = vmatpush2.msra.mxu0 0.0
        %2358 = vmatprep.subr.mxu0 0.0
        %2359 = vmatpush2.msra.mxu0 0.0
        %2360 = vmatprep.subr.mxu0 0.0
        %2361 = vmatpush2.msra.mxu0 0.0
        %2362 = vmatprep.subr.mxu0 0.0
        %2363 = vmatpush2.msra.mxu0 0.0
        %2364 = vmatprep.subr.mxu0 0.0
        %2365 = vmatpush2.msra.mxu0 0.0
        %2366 = vmatprep.subr.mxu0 0.0
        %2367 = vmatpush2.msra.mxu0 0.0
        %2368 = vmatprep.subr.mxu0 0.0
        %2369 = vmatpush2.msra.mxu0 0.0
        %2370 = vmatprep.subr.mxu0 0.0
        %2371 = vmatpush2.msra.mxu0 0.0
        %2372 = vmatprep.subr.mxu0 0.0
        %2373 = vmatpush2.msra.mxu0 0.0
        %2374 = vmatprep.subr.mxu0 0.0
        %2375 = vmatpush2.msra.mxu0 0.0
        %2376 = vmatprep.subr.mxu0 0.0
        %2377 = vmatpush2.msra.mxu0 0.0
        %2378 = vmatprep.subr.mxu0 0.0
        %2379 = vmatpush2.msra.mxu0 0.0
        %2380 = vmatprep.subr.mxu0 0.0
        %2381 = vmatpush2.msra.mxu0 0.0
        %2382 = vmatprep.subr.mxu0 0.0
        %2383 = vmatpush2.msra.mxu0 0.0
        %2384 = vmatprep.mubr.f32.mxu0 0.0
        %2385 = vmatmul.mubr.f32.gmra.mxu0 %v2318
        %v2386 = vpop.f32.mrf.mxu0
        %v2387 = vadd.f32 0.0, %v2386
        %v2388 = vpop.f32.mrf.mxu0
        %2389 = vdwg.mxu0
        %v2390 = vadd.f32 %v2305, %v2387
        %v2391 = vld [vmem:[%s10] sm:$0x1]
        %v2392 = vadd.f32 %v2390, %v2391
        %v2393 = vmax.f32 %v2392, 0.0
        %v2394 = vld [vmem:[%s11] sm:$0xff]
        %v2395 = vld [vmem:[%s11 + $0x8] sm:$0xff]
        %v2396 = vld [vmem:[%s11 + $0x10] sm:$0xff]
        %v2397 = vld [vmem:[%s11 + $0x18] sm:$0xff]
        %v2398 = vld [vmem:[%s11 + $0x20] sm:$0xff]
        %v2399 = vld [vmem:[%s11 + $0x28] sm:$0xff]
        %v2400 = vld [vmem:[%s11 + $0x30] sm:$0x3]
        %v2401 = vld [vmem:[%s12] sm:$0x1]
        %vm2402 = vcmask 408576
        %v2404 = vsel %vm2402, %v2393, 0
        %vm2406 = vcmask 1041408
        %v2408 = vsel %vm2406, %v2400, 0
        %2410 = vmatprep.subr.mxu0 0.0
        %2411 = vmatpush1.msra.mxu0 0.0
        %2412 = vmatprep.subr.mxu0 0.0
        %2413 = vmatpush1.msra.mxu0 0.0
        %2414 = vmatprep.subr.mxu0 0.0
        %2415 = vmatpush1.msra.mxu0 0.0
        %2416 = vmatprep.subr.mxu0 0.0
        %2417 = vmatpush1.msra.mxu0 0.0
        %2418 = vmatprep.subr.mxu0 0.0
        %2419 = vmatpush1.msra.mxu0 0.0
        %2420 = vmatprep.subr.mxu0 0.0
        %2421 = vmatpush1.msra.mxu0 0.0
        %2422 = vmatprep.subr.mxu0 0.0
        %2423 = vmatpush1.msra.mxu0 0.0
        %2424 = vmatprep.subr.mxu0 0.0
        %2425 = vmatpush1.msra.mxu0 0.0
        %2426 = vmatprep.subr.mxu0 0.0
        %2427 = vmatpush1.msra.mxu0 0.0
        %2428 = vmatprep.subr.mxu0 0.0
        %2429 = vmatpush1.msra.mxu0 %v2408
        %2430 = vmatprep.subr.mxu0 0.0
        %2431 = vmatpush1.msra.mxu0 %v2399
        %2432 = vmatprep.subr.mxu0 0.0
        %2433 = vmatpush1.msra.mxu0 %v2398
        %2434 = vmatprep.subr.mxu0 0.0
        %2435 = vmatpush1.msra.mxu0 %v2397
        %2436 = vmatprep.subr.mxu0 0.0
        %2437 = vmatpush1.msra.mxu0 %v2396
        %2438 = vmatprep.subr.mxu0 0.0
        %2439 = vmatpush1.msra.mxu0 %v2395
        %2440 = vmatprep.subr.mxu0 0.0
        %2441 = vmatpush1.msra.mxu0 %v2394
        %2442 = vmatprep.subr.mxu0 0.0
        %2443 = vmatpush2.msra.mxu0 0.0
        %2444 = vmatprep.subr.mxu0 0.0
        %2445 = vmatpush2.msra.mxu0 0.0
        %2446 = vmatprep.subr.mxu0 0.0
        %2447 = vmatpush2.msra.mxu0 0.0
        %2448 = vmatprep.subr.mxu0 0.0
        %2449 = vmatpush2.msra.mxu0 0.0
        %2450 = vmatprep.subr.mxu0 0.0
        %2451 = vmatpush2.msra.mxu0 0.0
        %2452 = vmatprep.subr.mxu0 0.0
        %2453 = vmatpush2.msra.mxu0 0.0
        %2454 = vmatprep.subr.mxu0 0.0
        %2455 = vmatpush2.msra.mxu0 0.0
        %2456 = vmatprep.subr.mxu0 0.0
        %2457 = vmatpush2.msra.mxu0 0.0
        %2458 = vmatprep.subr.mxu0 0.0
        %2459 = vmatpush2.msra.mxu0 0.0
        %2460 = vmatprep.subr.mxu0 0.0
        %2461 = vmatpush2.msra.mxu0 0.0
        %2462 = vmatprep.subr.mxu0 0.0
        %2463 = vmatpush2.msra.mxu0 0.0
        %2464 = vmatprep.subr.mxu0 0.0
        %2465 = vmatpush2.msra.mxu0 0.0
        %2466 = vmatprep.subr.mxu0 0.0
        %2467 = vmatpush2.msra.mxu0 0.0
        %2468 = vmatprep.subr.mxu0 0.0
        %2469 = vmatpush2.msra.mxu0 0.0
        %2470 = vmatprep.subr.mxu0 0.0
        %2471 = vmatpush2.msra.mxu0 0.0
        %2472 = vmatprep.subr.mxu0 0.0
        %2473 = vmatpush2.msra.mxu0 0.0
        %2474 = vmatprep.mubr.f32.mxu0 0.0
        %2475 = vmatmul.mubr.f32.gmra.mxu0 %v2404
        %v2476 = vpop.f32.mrf.mxu0
        %v2477 = vadd.f32 %v2401, %v2476
        %v2478 = vpop.f32.mrf.mxu0
        %2479 = vdwg.mxu0
        %vm2480 = vcmask 286720
        %2481 = vst.msk [vmem:[%s432] sm:$0x1] %vm2480, %v2477
        %s2482 = sand.u32 %s313, 1
        %s2483 = scalar_lea.sflag [#allocation3], %s2482
        %s2484 = sand.u32 %s313, 1
        %s2485 = scalar_lea.vmem [#allocation2], %s2484
        // Predicated region
        $region73: #{tpu_custom_call.1} parent=71 // pred_check
          %p2486 = pneg %p323
        $region74: #{tpu_custom_call.1} parent=71 // pred_check_branch
          %2488 = sbr.rel (%p2486) target = $region76
        $region75: #{tpu_custom_call.1} parent=71 // pred_region
          %s2490 = ssub.s32 16, 16
          %2491 = vsyncadd %s2483, %s2490
          %s2492 = smul.addr %s27, 16
          %s2493 = scalar_lea.hbm %s13, %s2492
          %s2495 = sshll.u32 %s2485, 4
          %s2496 = int_to_ptr.vmem [resolvable:$true] %s2495
          %2498 = dma.vmem_to_hbm [thread:$0]  %s2496, 16, %s2493, %s2483
        $region76: #{tpu_custom_call.1} parent=71 // pred_fallthru
          _
      $region72: #{tpu_custom_call.1} parent=5 // pred_fallthru
        _
      %p2499 = scmp.le.s32.totalorder 2, %s22
      // Predicated region
      $region77: #{tpu_custom_call.1} parent=5 // pred_check
        %p2500 = pneg %p2499
      $region78: #{tpu_custom_call.1} parent=5 // pred_check_branch
        %2502 = sbr.rel (%p2500) target = $region80
      $region79: #{tpu_custom_call.1} parent=5 // pred_region
        %s2503 = ssub.s32 %s22, 2
        // Predicated region
        $region81: #{tpu_custom_call.1} parent=79 // pred_check
          %p2504 = pneg %p329
        $region82: #{tpu_custom_call.1} parent=79 // pred_check_branch
          %2506 = sbr.rel (%p2504) target = $region84
        $region83: #{tpu_custom_call.1} parent=79 // pred_region
          %s2507 = sand.u32 %s314, 1
          %s2508 = scalar_lea.sflag [#allocation3], %s2507
          %s2509 = sand.u32 %s314, 1
          %s2510 = scalar_lea.vmem [#allocation2], %s2509
          %2511 = dma.done %s2508, 16
        $region84: #{tpu_custom_call.1} parent=79 // pred_fallthru
          _
      $region80: #{tpu_custom_call.1} parent=5 // pred_fallthru
        _
    $region6: #{tpu_custom_call.1} parent=1 // loop_footer
      %s26 = sadd.s32 1, %s22
    $region7: #{tpu_custom_call.1} parent=1 // loop_footer_branch
      %21 = sbr.rel target = $region3
    $region8: #{tpu_custom_call.1} parent=1 // loop_exit
      _
    %2512 = vsyncpa [#allocation3], 1
    %s2513 = scalar_lea.sflag [#allocation3], 1
    %2514 = vsyncpa %s2513, 1

</llo_original>
